<compile_context>
chip_gen: v6e
topology: v6e:2x2x1
jax: 0.10.0
libtpu: 0.0.40
codegen_flags: <defaults>
</compile_context>

<pallas_src>
import functools

import jax
import jax.numpy as jnp
from jax import lax
from jax.experimental import pallas as pl
from jax.experimental.pallas import tpu as pltpu

_STAT_LANES = 128       # lane-dense packed CE-stats slab (lane0=loss, lane1=valid, lane2=correct-pred)
_NEG_INF = float("-inf")


# ----------------------------------------------------------------------------
# Chip-aware configuration helpers
# ----------------------------------------------------------------------------
def _detect_gen():
    try:
        kind = jax.devices()[0].device_kind.lower()
    except Exception:
        return None
    if "v7" in kind or "7x" in kind:
        return "v7"
    if "v6" in kind or "trillium" in kind:
        return "v6"
    if "v5" in kind:
        return "v5"
    if "v4" in kind:
        return "v4"
    return None


_GEN = _detect_gen()


def _vmem_cap_bytes():
    # Leave ~25% headroom over physical VMEM for compiler internal scratch.
    try:
        info = pltpu.get_tpu_info()
        cap = getattr(info, "vmem_capacity_bytes", None)
        if cap:
            return int(cap) * 3 // 4
    except Exception:
        pass
    if _GEN == "v7":
        return 48 << 20            # 64 MiB physical
    if _GEN in ("v5", "v6"):
        return 96 << 20            # 128 MiB physical
    return 48 << 20                # conservative default


_VMEM_CAP = _vmem_cap_bytes()


def _vmem_limit_bytes(*buffer_bytes):
    # double-buffered pipeline tiles + headroom, clamped to the chip-aware cap
    est = 2 * sum(buffer_bytes)
    return int(min(max(est + (1 << 20), 32 << 20), _VMEM_CAP))


def _round_up(x, m):
    return ((x + m - 1) // m) * m


def _choose_tile(dim, pref, quantum, min_tiles=1):
    """Pick a tile size (multiple of `quantum`, <= pref) and the padded dim it divides.
    If dim <= quantum, the full dimension is used as a single (always legal) block."""
    if dim <= quantum:
        return dim, dim
    t = min(pref, _round_up(dim, quantum))
    t = max(quantum, (t // quantum) * quantum)
    if min_tiles > 1:
        cap = max(quantum, _round_up(-(-dim // min_tiles), quantum))
        t = min(t, cap)
    return t, _round_up(dim, t)


def _divisor_tile(dim, pref=512, quantum=128):
    """Largest multiple of `quantum` <= pref dividing dim; else the full dim (legal full-extent block)."""
    if dim <= pref or dim % quantum != 0:
        return dim
    t = (pref // quantum) * quantum
    while t >= quantum:
        if dim % t == 0:
            return t
        t -= quantum
    return dim


def _pad_axis(x, target, axis, value=0):
    pad = target - x.shape[axis]
    if pad <= 0:
        return x
    widths = [(0, 0)] * x.ndim
    widths[axis] = (0, pad)
    return jnp.pad(x, widths, constant_values=value)


# ----------------------------------------------------------------------------
# Kernel 1: linear layer (encoder projector)  y = x @ w + b
# bf16 operands on the MXU, f32 accumulate, tiled over M and N (both parallel).
# ----------------------------------------------------------------------------
def _linear_kernel(x_ref, w_ref, b_ref, o_ref):
    o_ref[...] = (
        jnp.dot(x_ref[...], w_ref[...], preferred_element_type=jnp.float32)
        + b_ref[...]
    ).astype(o_ref.dtype)


def linear_pallas(x, w, b, *, tm_pref=256, tn_pref=512):
    M, K = x.shape
    Kw, N = w.shape
    assert K == Kw
    tm, Mp = _choose_tile(M, tm_pref, 16, min_tiles=2)    # bf16 sublane quantum = 16
    tn, Np = _choose_tile(N, tn_pref, 128)

    xb = _pad_axis(x.astype(jnp.bfloat16), Mp, 0)
    wb = _pad_axis(w.astype(jnp.bfloat16), Np, 1)
    bb = _pad_axis(b.reshape(1, N).astype(jnp.float32), Np, 1)

    vmem_limit = _vmem_limit_bytes(tm * K * 2, K * tn * 2, tn * 4, tm * tn * 2)
    out = pl.pallas_call(
        _linear_kernel,
        out_shape=jax.ShapeDtypeStruct((Mp, Np), jnp.bfloat16),
        grid=(Mp // tm, Np // tn),
        in_specs=[
            pl.BlockSpec((tm, K), lambda i, j: (i, 0)),
            pl.BlockSpec((K, tn), lambda i, j: (0, j)),
            pl.BlockSpec((1, tn), lambda i, j: (0, j)),
        ],
        out_specs=pl.BlockSpec((tm, tn), lambda i, j: (i, j)),
        compiler_params=pltpu.CompilerParams(
            dimension_semantics=("parallel", "parallel"),
            vmem_limit_bytes=vmem_limit),
    )(xb, wb, bb)
    return out[:M, :N]


# ----------------------------------------------------------------------------
# Kernel 2: modality merge.
#   encoder_outs_pad[i, start:start+len] = encoder_outs[i, :len]
#   inputs_embeds = encoder_outs_pad + inputs_embeds * ~modality_mask[:, :, None]
# Per (batch row, D tile): zero encoder rows beyond `len`, place into a zero-padded (T, tD)
# VMEM slab, rotate it to position `start` (XLU), and select against the text embeddings (VPU).
# The modality span is derived from the prefetched (start, mask_len) scalars — no mask stream,
# no concatenate, no one-hot MXU scatter; activations stream in/out as bf16.
# ----------------------------------------------------------------------------
def _merge_kernel(start_ref, mlen_ref, enc_ref, emb_ref, o_ref, pad_sc):
    i = pl.program_id(0)
    start = start_ref[i]
    mlen = mlen_ref[i]
    T_enc = enc_ref.shape[1]
    T = emb_ref.shape[1]
    enc_len = jnp.minimum(mlen, T_enc)

    # Keep only the first `enc_len` encoder rows; build the zero-padded (T, tD) slab in scratch.
    enc = enc_ref[0]                                               # (T_enc, tD) bf16
    row = lax.broadcasted_iota(jnp.int32, (T_enc, 1), 0)
    pad_sc[0:T_enc, :] = jnp.where(row < enc_len, enc.astype(jnp.float32), 0.0)
    if T > T_enc:
        pad_sc[T_enc:T, :] = jnp.zeros((T - T_enc, pad_sc.shape[1]), jnp.float32)

    # Circular rotate: encoder rows land at [start, start+enc_len) (contiguous-mask assumption,
    # start + enc_len <= T). Rows wrapping past T are zeros.
    # TODO(synk): move the roll to bf16 on v6e/v7x once packed dynamic sublane rotate is verified.
    placed = pltpu.roll(pad_sc[...], shift=start, axis=0).astype(jnp.bfloat16)   # (T, tD)

    t_idx = lax.broadcasted_iota(jnp.int32, (T, 1), 0)
    in_span = jnp.logical_and(t_idx >= start, t_idx < start + mlen)
    o_ref[0] = jnp.where(in_span, placed, emb_ref[0])


def merge_pallas(start, mask_len, enc, emb):
    B, T_enc, D = enc.shape
    _, T, De = emb.shape
    assert De == D and T >= T_enc
    tD = _divisor_tile(D, 512, 128)

    vmem_limit = _vmem_limit_bytes(
        T_enc * tD * 2, T * tD * 2, T * tD * 2,   # enc / emb / out streams (bf16)
        T * tD * 2)                               # f32 scratch (single-buffered; over-counted is fine)

    return pl.pallas_call(
        _merge_kernel,
        out_shape=jax.ShapeDtypeStruct((B, T, D), jnp.bfloat16),
        grid_spec=pltpu.PrefetchScalarGridSpec(
            num_scalar_prefetch=2,
            grid=(B, D // tD),
            in_specs=[
                pl.BlockSpec((1, T_enc, tD), lambda i, d, s, l: (i, 0, d)),
                pl.BlockSpec((1, T, tD), lambda i, d, s, l: (i, 0, d)),
            ],
            out_specs=pl.BlockSpec((1, T, tD), lambda i, d, s, l: (i, 0, d)),
            scratch_shapes=[pltpu.VMEM((T, tD), jnp.float32)],
        ),
        compiler_params=pltpu.CompilerParams(
            dimension_semantics=("parallel", "parallel"),
            vmem_limit_bytes=vmem_limit),
    )(start.astype(jnp.int32), mask_len.astype(jnp.int32),
      enc.astype(jnp.bfloat16), emb.astype(jnp.bfloat16))


# ----------------------------------------------------------------------------
# Kernel 3: FUSED LM head + shifted cross-entropy / accuracy.
# Grid = (M tiles, V tiles); vocab axis last (accumulators). Per M-tile VMEM scratch
# holds running max / sum-exp / correct-class logit; the lane-dense stats slab is
# written once on the last vocab tile. Accuracy hit <=> correct-class logit equals the
# global max (drops the separate argmax reductions). Logits are produced in f32 on the
# MXU and written to HBM exactly once as bf16 (or skipped entirely).
# ----------------------------------------------------------------------------
def _lm_head_ce_kernel(x_ref, w_ref, b_ref, lab_ref, *refs, exp_dtype, with_logits):
    if with_logits:
        logits_ref, stats_ref, m_sc, l_sc, corr_sc = refs
    else:
        stats_ref, m_sc, l_sc, corr_sc = refs
        logits_ref = None

    j = pl.program_id(1)
    tv = w_ref.shape[1]

    @pl.when(j == 0)
    def _():
        m_sc[...] = jnp.full_like(m_sc, _NEG_INF)
        l_sc[...] = jnp.zeros_like(l_sc)
        corr_sc[...] = jnp.zeros_like(corr_sc)

    # bf16 operands -> MXU, f32 accumulate. Padded vocab columns carry a -inf bias.
    logits = (jnp.dot(x_ref[...], w_ref[...], preferred_element_type=jnp.float32)
              + b_ref[...])                                        # (tm, tv) f32
    if logits_ref is not None:
        logits_ref[...] = logits.astype(logits_ref.dtype)

    labels = lab_ref[...]                                          # (tm, 1) int32
    col = lax.broadcasted_iota(jnp.int32, logits.shape, 1) + j * tv  # global vocab index

    # online log-sum-exp (exp in bf16 on v6e/v7x, f32 elsewhere)
    tile_max = jnp.max(logits, axis=-1, keepdims=True)
    m_new = jnp.maximum(m_sc[...], tile_max)
    p = jnp.exp((logits - m_new).astype(exp_dtype)).astype(jnp.float32)
    l_sc[...] = (l_sc[...] * jnp.exp(m_sc[...] - m_new)
                 + jnp.sum(p, axis=-1, keepdims=True))
    m_sc[...] = m_new

    # correct-class logit (label hits exactly one vocab tile; -100 / padded rows never match)
    corr_sc[...] += jnp.sum(jnp.where(col == labels, logits, 0.0),
                            axis=-1, keepdims=True)

    @pl.when(j == pl.num_programs(1) - 1)
    def _():
        valid = (labels != -100).astype(jnp.float32)               # (tm, 1)
        loss_row = (m_sc[...] + jnp.log(l_sc[...]) - corr_sc[...]) * valid
        # argmax == label  <=>  correct-class logit attains the global max
        # (exact ties count as correct; torch tie-break is unspecified anyway)
        hit = (corr_sc[...] >= m_sc[...]).astype(jnp.float32) * valid
        lane = lax.broadcasted_iota(jnp.int32, stats_ref.shape, 1)
        stats = jnp.where(lane == 0, loss_row, 0.0)
        stats = jnp.where(lane == 1, valid, stats)
        stats = jnp.where(lane == 2, hit, stats)
        stats_ref[...] = stats


def lm_head_ce_pallas(x, w, b, labels, *, tm_pref=None, tv_pref=512, return_logits=True):
    """Returns (logits bf16 (M, V) or None, stats f32 (M, 128)) with stats lanes
    0 = per-row CE loss (0 for ignored rows), 1 = valid flag, 2 = correct-argmax flag."""
    M, K = x.shape
    Kw, V = w.shape
    assert K == Kw and labels.shape == (M, 1)

    if tm_pref is None:
        # v6e has 128 MiB VMEM and the fastest relative MXU/HBM ratio -> biggest M tile;
        # v7x (64 MiB VMEM, 2 TCs) and v5e use 512. Keep >= 2 M tiles for megacore.
        tm_pref = 1024 if _GEN == "v6" else 512
    tm, Mp = _choose_tile(M, tm_pref, 16, min_tiles=2)
    tv, Vp = _choose_tile(V, tv_pref, 128)
    grid = (Mp // tm, Vp // tv)

    xb = _pad_axis(x.astype(jnp.bfloat16), Mp, 0)
    wb = _pad_axis(w.astype(jnp.bfloat16), Vp, 1)
    bb = _pad_axis(b.reshape(1, V).astype(jnp.float32), Vp, 1, value=_NEG_INF)
    lb = _pad_axis(labels.astype(jnp.int32), Mp, 0, value=-100)

    logits_tile_bytes = tm * tv * 2 if return_logits else 0
    vmem_limit = _vmem_limit_bytes(
        tm * K * 2, K * tv * 2, tv * 4, tm * 4,        # inputs
        logits_tile_bytes, tm * _STAT_LANES * 4,       # outputs
        3 * tm * 4)                                    # scratch accumulators

    out_shape = [jax.ShapeDtypeStruct((Mp, _STAT_LANES), jnp.float32)]
    out_specs = [pl.BlockSpec((tm, _STAT_LANES), lambda i, j: (i, 0))]
    if return_logits:
        out_shape = [jax.ShapeDtypeStruct((Mp, Vp), jnp.bfloat16)] + out_shape
        out_specs = [pl.BlockSpec((tm, tv), lambda i, j: (i, j))] + out_specs

    exp_dtype = jnp.bfloat16 if _GEN in ("v6", "v7") else jnp.float32
    kernel = functools.partial(_lm_head_ce_kernel, exp_dtype=exp_dtype,
                               with_logits=return_logits)

    outs = pl.pallas_call(
        kernel,
        out_shape=tuple(out_shape),
        grid_spec=pltpu.PrefetchScalarGridSpec(
            num_scalar_prefetch=0,
            grid=grid,
            in_specs=[
                pl.BlockSpec((tm, K), lambda i, j: (i, 0)),   # activations resident over vocab sweep
                pl.BlockSpec((K, tv), lambda i, j: (0, j)),   # weight tiles stream over V
                pl.BlockSpec((1, tv), lambda i, j: (0, j)),
                pl.BlockSpec((tm, 1), lambda i, j: (i, 0)),   # shifted labels
            ],
            out_specs=tuple(out_specs),
            scratch_shapes=[
                pltpu.VMEM((tm, 1), jnp.float32),   # running max
                pltpu.VMEM((tm, 1), jnp.float32),   # running sum-exp
                pltpu.VMEM((tm, 1), jnp.float32),   # correct-class logit
            ]),
        compiler_params=pltpu.CompilerParams(
            dimension_semantics=("parallel", "arbitrary"),
            vmem_limit_bytes=vmem_limit),
    )(xb, wb, bb, lb)

    if return_logits:
        logits_pad, stats = outs
        return logits_pad[:M, :V], stats[:M]
    stats = outs[0] if isinstance(outs, (tuple, list)) else outs
    return None, stats[:M]


# ----------------------------------------------------------------------------
# slam_model.forward (synthetic instantiation)
# ----------------------------------------------------------------------------
@functools.partial(jax.jit, static_argnames=("inference_mode",))
def slam_forward(params, input_ids, attention_mask, labels, audio_mel, modality_mask,
                 inference_mode=False):
    B, T = input_ids.shape
    _, T_enc, D_mel = audio_mel.shape
    D = params["proj_w"].shape[1]
    V = params["lm_w"].shape[1]

    # --- encoder (None) + linear encoder_projector (Pallas bf16 matmul) ---
    encoder_outs = audio_mel                                   # "if self.encoder is None" path
    proj = linear_pallas(encoder_outs.reshape(B * T_enc, D_mel),
                         params["proj_w"], params["proj_b"]).reshape(B, T_enc, D)

    # --- embed_tokens (input_ids[input_ids == -1] = 0) ---
    ids = jnp.where(input_ids == -1, 0, input_ids)
    inputs_embeds = jnp.take(params["embed"].astype(jnp.bfloat16), ids, axis=0)  # gather glue

    # --- modality merge (Pallas kernel) ---
    # start = first True position; assumes a contiguous modality mask (same as the torch code).
    start = jnp.argmax(modality_mask.astype(jnp.int32), axis=1).astype(jnp.int32)
    mask_len = jnp.sum(modality_mask.astype(jnp.int32), axis=1).astype(jnp.int32)
    merged = merge_pallas(start, mask_len, proj, inputs_embeds)

    if inference_mode:
        return merged, attention_mask

    # --- fused LM head + HF-style shifted CE + compute_accuracy(ignore=-100) ---
    shift_labels = jnp.concatenate(
        [labels[:, 1:], jnp.full((B, 1), -100, labels.dtype)], axis=1)
    logits_flat, stats = lm_head_ce_pallas(
        merged.reshape(B * T, D), params["lm_w"], params["lm_b"],
        shift_labels.reshape(B * T, 1), return_logits=True)
    logits = logits_flat.reshape(B, T, V)

    n_valid = jnp.maximum(jnp.sum(stats[:, 1]), 1.0)
    loss = jnp.sum(stats[:, 0]) / n_valid
    acc = jnp.sum(stats[:, 2]) / n_valid
    return logits, loss, acc


def init_params(key, d_mel, d_llm, vocab):
    k1, k2, k3, _ = jax.random.split(key, 4)
    scale = 0.02
    return {
        "proj_w": scale * jax.random.normal(k1, (d_mel, d_llm), jnp.float32),
        "proj_b": jnp.zeros((d_llm,), jnp.float32),
        "embed": scale * jax.random.normal(k2, (vocab, d_llm), jnp.float32),
        "lm_w": scale * jax.random.normal(k3, (d_llm, vocab), jnp.float32),
        "lm_b": jnp.zeros((vocab,), jnp.float32),
    }


if __name__ == "__main__":
    B, T, T_enc, D_mel, D, V = 2, 16, 8, 32, 32, 128
    key = jax.random.PRNGKey(0)
    kp, ka, ki = jax.random.split(key, 3)

    params = init_params(kp, D_mel, D, V)

    audio_mel = jax.random.normal(ka, (B, T_enc, D_mel), jnp.float32)
    input_ids = jax.random.randint(ki, (B, T), 0, V).astype(jnp.int32)
    input_ids = input_ids.at[0, 0].set(-1)  # exercise the (-1 -> 0) path
    attention_mask = jnp.ones((B, T), jnp.int32)

    # modality mask: batch 0 covers positions [1, 7), batch 1 covers [2, 7)
    pos = jnp.arange(T)[None, :]
    starts = jnp.array([[1], [2]])
    ends = jnp.array([[7], [7]])
    modality_mask = (pos >= starts) & (pos < ends)

    # labels: -100 over the modality/prompt region, token ids elsewhere
    labels = jnp.where(pos < ends, -100, input_ids).astype(jnp.int32)

    logits, loss, acc = slam_forward(params, input_ids, attention_mask, labels,
                                     audio_mel, modality_mask)
    jax.block_until_ready((logits, loss, acc))
    print("KERNEL_OK")
</pallas_src>

<mosaic_0001>
module attributes {stable_mosaic.version = 11 : i64} {
  func.func @_linear_kernel(%arg0: i32, %arg1: i32, %arg2: memref<16x32xbf16, #tpu.memory_space<vmem>>, %arg3: memref<32x32xbf16, #tpu.memory_space<vmem>>, %arg4: memref<1x32xf32, #tpu.memory_space<vmem>>, %arg5: memref<16x32xbf16, #tpu.memory_space<vmem>>) attributes {dimension_semantics = [#tpu.dimension_semantics<parallel>, #tpu.dimension_semantics<parallel>], iteration_bounds = array<i64: 1, 1>, scalar_prefetch = 0 : i64, scratch_operands = 0 : i64, tpu.core_type = #tpu.core_type<tc>, window_params = [{transform_indices = @transform_0, window_bounds = array<i64: 16, 32>}, {transform_indices = @transform_1, window_bounds = array<i64: 32, 32>}, {transform_indices = @transform_2, window_bounds = array<i64: 1, 32>}, {transform_indices = @transform_3, window_bounds = array<i64: 16, 32>}]} {
    %c0 = arith.constant 0 : index
    %c0_0 = arith.constant 0 : index
    %0 = vector.load %arg2[%c0, %c0_0] : memref<16x32xbf16, #tpu.memory_space<vmem>>, vector<16x32xbf16>
    %c0_1 = arith.constant 0 : index
    %c0_2 = arith.constant 0 : index
    %1 = vector.load %arg3[%c0_1, %c0_2] : memref<32x32xbf16, #tpu.memory_space<vmem>>, vector<32x32xbf16>
    %cst = arith.constant dense<0.000000e+00> : vector<16x32xf32>
    %2 = tpu.matmul %0, %1, %cst {dimension_numbers = #tpu.dot_dimension_numbers<[1], [0], [0], [1], [0, 0, 1, 1], [], []>} : vector<16x32xbf16>, vector<32x32xbf16>, vector<16x32xf32> -> vector<16x32xf32>
    %c0_3 = arith.constant 0 : index
    %c0_4 = arith.constant 0 : index
    %3 = vector.load %arg4[%c0_3, %c0_4] : memref<1x32xf32, #tpu.memory_space<vmem>>, vector<1x32xf32>
    %4 = vector.broadcast %3 : vector<1x32xf32> to vector<16x32xf32>
    %5 = arith.addf %2, %4 : vector<16x32xf32>
    %6 = arith.truncf %5 : vector<16x32xf32> to vector<16x32xbf16>
    %c0_5 = arith.constant 0 : index
    %c0_6 = arith.constant 0 : index
    %7 = vector.load %arg5[%c0_5, %c0_6] : memref<16x32xbf16, #tpu.memory_space<vmem>>, vector<16x32xbf16>
    tpu.vector_store %arg5[%c0_5, %c0_6], %6 {strides = array<i32>} : memref<16x32xbf16, #tpu.memory_space<vmem>>, vector<16x32xbf16>,
    return
  }
  func.func @transform_0(%arg0: i32, %arg1: i32) -> (i32, i32) {
    %c0_i32 = arith.constant 0 : i32
    %c0_i32_0 = arith.constant 0 : i32
    return %arg0, %c0_i32 : i32, i32
  }
  func.func @transform_1(%arg0: i32, %arg1: i32) -> (i32, i32) {
    %c0_i32 = arith.constant 0 : i32
    %c0_i32_0 = arith.constant 0 : i32
    return %c0_i32, %arg1 : i32, i32
  }
  func.func @transform_2(%arg0: i32, %arg1: i32) -> (i32, i32) {
    %c0_i32 = arith.constant 0 : i32
    %c0_i32_0 = arith.constant 0 : i32
    return %c0_i32, %arg1 : i32, i32
  }
  func.func @transform_3(%arg0: i32, %arg1: i32) -> (i32, i32) {
    %c0_i32 = arith.constant 0 : i32
    return %arg0, %arg1 : i32, i32
  }
}

module attributes {stable_mosaic.version = 11 : i64} {
  func.func @_merge_kernel(%arg0: i32, %arg1: i32, %arg2: memref<2xi32, #tpu.memory_space<smem>>, %arg3: memref<2xi32, #tpu.memory_space<smem>>, %arg4: memref<1x8x32xbf16, #tpu.memory_space<vmem>>, %arg5: memref<1x16x32xbf16, #tpu.memory_space<vmem>>, %arg6: memref<1x16x32xbf16, #tpu.memory_space<vmem>>, %arg7: memref<16x32xf32, #tpu.memory_space<vmem>>) attributes {dimension_semantics = [#tpu.dimension_semantics<parallel>, #tpu.dimension_semantics<parallel>], iteration_bounds = array<i64: 2, 1>, scalar_prefetch = 2 : i64, scratch_operands = 1 : i64, tpu.core_type = #tpu.core_type<tc>, window_params = [{transform_indices = @transform_0, window_bounds = array<i64: 1, 8, 32>}, {transform_indices = @transform_1, window_bounds = array<i64: 1, 16, 32>}, {transform_indices = @transform_2, window_bounds = array<i64: 1, 16, 32>}]} {
    %0 = arith.index_cast %arg0 : i32 to index
    %1 = memref.load %arg2[%0] : memref<2xi32, #tpu.memory_space<smem>>
    %2 = arith.index_cast %arg0 : i32 to index
    %3 = memref.load %arg3[%2] : memref<2xi32, #tpu.memory_space<smem>>
    %c8_i32 = arith.constant 8 : i32
    %4 = arith.minsi %3, %c8_i32 : i32
    %c0 = arith.constant 0 : index
    %c0_0 = arith.constant 0 : index
    %c0_1 = arith.constant 0 : index
    %5 = vector.load %arg4[%c0, %c0_0, %c0_1] : memref<1x8x32xbf16, #tpu.memory_space<vmem>>, vector<1x8x32xbf16>
    %6 = vector.shape_cast %5 : vector<1x8x32xbf16> to vector<8x32xbf16>
    %7 = tpu.iota {dimensions = array<i32: 0>} : vector<8x1xi32>
    %8 = vector.broadcast %4 : i32 to vector<8x1xi32>
    %9 = arith.cmpi slt, %7, %8 : vector<8x1xi32>
    %10 = arith.extf %6 : vector<8x32xbf16> to vector<8x32xf32>
    %cst = arith.constant 0.000000e+00 : f32
    %11 = vector.shape_cast %9 : vector<8x1xi1> to vector<8x1xi1>
    %12 = vector.broadcast %11 : vector<8x1xi1> to vector<8x32xi1>
    %13 = vector.broadcast %cst : f32 to vector<8x32xf32>
    %14 = arith.select %12, %10, %13 : vector<8x32xi1>, vector<8x32xf32>
    %c0_2 = arith.constant 0 : index
    %c0_3 = arith.constant 0 : index
    %15 = vector.load %arg7[%c0_2, %c0_3] : memref<16x32xf32, #tpu.memory_space<vmem>>, vector<8x32xf32>
    tpu.vector_store %arg7[%c0_2, %c0_3], %14 {strides = array<i32>} : memref<16x32xf32, #tpu.memory_space<vmem>>, vector<8x32xf32>,
    %cst_4 = arith.constant 0.000000e+00 : f32
    %16 = vector.broadcast %cst_4 : f32 to vector<8x32xf32>
    %c8 = arith.constant 8 : index
    %c0_5 = arith.constant 0 : index
    %17 = vector.load %arg7[%c8, %c0_5] : memref<16x32xf32, #tpu.memory_space<vmem>>, vector<8x32xf32>
    tpu.vector_store %arg7[%c8, %c0_5], %16 {strides = array<i32>} : memref<16x32xf32, #tpu.memory_space<vmem>>, vector<8x32xf32>,
    %c0_6 = arith.constant 0 : index
    %c0_7 = arith.constant 0 : index
    %18 = vector.load %arg7[%c0_6, %c0_7] : memref<16x32xf32, #tpu.memory_space<vmem>>, vector<16x32xf32>
    %19 = tpu.dynamic_rotate %18 by %1 dim 0 : vector<16x32xf32>, i32 -> vector<16x32xf32>
    %20 = arith.truncf %19 : vector<16x32xf32> to vector<16x32xbf16>
    %21 = tpu.iota {dimensions = array<i32: 0>} : vector<16x1xi32>
    %22 = vector.broadcast %1 : i32 to vector<16x1xi32>
    %23 = arith.cmpi sge, %21, %22 : vector<16x1xi32>
    %24 = arith.addi %1, %3 : i32
    %25 = vector.broadcast %24 : i32 to vector<16x1xi32>
    %26 = arith.cmpi slt, %21, %25 : vector<16x1xi32>
    %27 = arith.andi %23, %26 : vector<16x1xi1>
    %c0_8 = arith.constant 0 : index
    %c0_9 = arith.constant 0 : index
    %c0_10 = arith.constant 0 : index
    %28 = vector.load %arg5[%c0_8, %c0_9, %c0_10] : memref<1x16x32xbf16, #tpu.memory_space<vmem>>, vector<1x16x32xbf16>
    %29 = vector.shape_cast %28 : vector<1x16x32xbf16> to vector<16x32xbf16>
    %30 = vector.shape_cast %27 : vector<16x1xi1> to vector<16x1xi1>
    %31 = vector.broadcast %30 : vector<16x1xi1> to vector<16x32xi1>
    %32 = arith.select %31, %20, %29 : vector<16x32xi1>, vector<16x32xbf16>
    %c0_11 = arith.constant 0 : index
    %c0_12 = arith.constant 0 : index
    %c0_13 = arith.constant 0 : index
    %33 = vector.load %arg6[%c0_11, %c0_12, %c0_13] : memref<1x16x32xbf16, #tpu.memory_space<vmem>>, vector<1x16x32xbf16>
    %34 = vector.shape_cast %33 : vector<1x16x32xbf16> to vector<16x32xbf16>
    %35 = vector.shape_cast %32 : vector<16x32xbf16> to vector<1x16x32xbf16>
    tpu.vector_store %arg6[%c0_11, %c0_12, %c0_13], %35 {strides = array<i32>} : memref<1x16x32xbf16, #tpu.memory_space<vmem>>, vector<1x16x32xbf16>,
    return
  }
  func.func @transform_0(%arg0: i32, %arg1: i32, %arg2: memref<2xi32, #tpu.memory_space<smem>>, %arg3: memref<2xi32, #tpu.memory_space<smem>>) -> (i32, i32, i32) {
    %c0_i32 = arith.constant 0 : i32
    %c0_i32_0 = arith.constant 0 : i32
    return %arg0, %c0_i32, %arg1 : i32, i32, i32
  }
  func.func @transform_1(%arg0: i32, %arg1: i32, %arg2: memref<2xi32, #tpu.memory_space<smem>>, %arg3: memref<2xi32, #tpu.memory_space<smem>>) -> (i32, i32, i32) {
    %c0_i32 = arith.constant 0 : i32
    %c0_i32_0 = arith.constant 0 : i32
    return %arg0, %c0_i32, %arg1 : i32, i32, i32
  }
  func.func @transform_2(%arg0: i32, %arg1: i32, %arg2: memref<2xi32, #tpu.memory_space<smem>>, %arg3: memref<2xi32, #tpu.memory_space<smem>>) -> (i32, i32, i32) {
    %c0_i32 = arith.constant 0 : i32
    %c0_i32_0 = arith.constant 0 : i32
    return %arg0, %c0_i32, %arg1 : i32, i32, i32
  }
}

module attributes {stable_mosaic.version = 11 : i64} {
  func.func @_lm_head_ce_kernel(%arg0: i32, %arg1: i32, %arg2: memref<16x32xbf16, #tpu.memory_space<vmem>>, %arg3: memref<32x128xbf16, #tpu.memory_space<vmem>>, %arg4: memref<1x128xf32, #tpu.memory_space<vmem>>, %arg5: memref<16x1xi32, #tpu.memory_space<vmem>>, %arg6: memref<16x128xbf16, #tpu.memory_space<vmem>>, %arg7: memref<16x128xf32, #tpu.memory_space<vmem>>, %arg8: memref<16x1xf32, #tpu.memory_space<vmem>>, %arg9: memref<16x1xf32, #tpu.memory_space<vmem>>, %arg10: memref<16x1xf32, #tpu.memory_space<vmem>>) attributes {dimension_semantics = [#tpu.dimension_semantics<parallel>, #tpu.dimension_semantics<arbitrary>], iteration_bounds = array<i64: 2, 1>, scalar_prefetch = 0 : i64, scratch_operands = 3 : i64, tpu.core_type = #tpu.core_type<tc>, window_params = [{transform_indices = @transform_0, window_bounds = array<i64: 16, 32>}, {transform_indices = @transform_1, window_bounds = array<i64: 32, 128>}, {transform_indices = @transform_2, window_bounds = array<i64: 1, 128>}, {transform_indices = @transform_3, window_bounds = array<i64: 16, 1>}, {transform_indices = @transform_4, window_bounds = array<i64: 16, 128>}, {transform_indices = @transform_5, window_bounds = array<i64: 16, 128>}]} {
    %c0_i32 = arith.constant 0 : i32
    %0 = arith.cmpi eq, %arg1, %c0_i32 : i32
    %1 = arith.extui %0 : i1 to i32
    %c0_i32_0 = arith.constant 0 : i32
    %2 = arith.cmpi ne, %1, %c0_i32_0 : i32
    scf.if %2 {
      %cst_30 = arith.constant 0xFF800000 : f32
      %45 = vector.broadcast %cst_30 : f32 to vector<16x1xf32>
      %c0_31 = arith.constant 0 : index
      %c0_32 = arith.constant 0 : index
      %46 = vector.load %arg8[%c0_31, %c0_32] : memref<16x1xf32, #tpu.memory_space<vmem>>, vector<16x1xf32>
      tpu.vector_store %arg8[%c0_31, %c0_32], %45 {strides = array<i32>} : memref<16x1xf32, #tpu.memory_space<vmem>>, vector<16x1xf32>,
      %cst_33 = arith.constant 0.000000e+00 : f32
      %47 = vector.broadcast %cst_33 : f32 to vector<16x1xf32>
      %c0_34 = arith.constant 0 : index
      %c0_35 = arith.constant 0 : index
      %48 = vector.load %arg9[%c0_34, %c0_35] : memref<16x1xf32, #tpu.memory_space<vmem>>, vector<16x1xf32>
      tpu.vector_store %arg9[%c0_34, %c0_35], %47 {strides = array<i32>} : memref<16x1xf32, #tpu.memory_space<vmem>>, vector<16x1xf32>,
      %cst_36 = arith.constant 0.000000e+00 : f32
      %49 = vector.broadcast %cst_36 : f32 to vector<16x1xf32>
      %c0_37 = arith.constant 0 : index
      %c0_38 = arith.constant 0 : index
      %50 = vector.load %arg10[%c0_37, %c0_38] : memref<16x1xf32, #tpu.memory_space<vmem>>, vector<16x1xf32>
      tpu.vector_store %arg10[%c0_37, %c0_38], %49 {strides = array<i32>} : memref<16x1xf32, #tpu.memory_space<vmem>>, vector<16x1xf32>,
    } else {
    }
    %c0 = arith.constant 0 : index
    %c0_1 = arith.constant 0 : index
    %3 = vector.load %arg2[%c0, %c0_1] : memref<16x32xbf16, #tpu.memory_space<vmem>>, vector<16x32xbf16>
    %c0_2 = arith.constant 0 : index
    %c0_3 = arith.constant 0 : index
    %4 = vector.load %arg3[%c0_2, %c0_3] : memref<32x128xbf16, #tpu.memory_space<vmem>>, vector<32x128xbf16>
    %cst = arith.constant dense<0.000000e+00> : vector<16x128xf32>
    %5 = tpu.matmul %3, %4, %cst {dimension_numbers = #tpu.dot_dimension_numbers<[1], [0], [0], [1], [0, 0, 1, 1], [], []>} : vector<16x32xbf16>, vector<32x128xbf16>, vector<16x128xf32> -> vector<16x128xf32>
    %c0_4 = arith.constant 0 : index
    %c0_5 = arith.constant 0 : index
    %6 = vector.load %arg4[%c0_4, %c0_5] : memref<1x128xf32, #tpu.memory_space<vmem>>, vector<1x128xf32>
    %7 = vector.broadcast %6 : vector<1x128xf32> to vector<16x128xf32>
    %8 = arith.addf %5, %7 : vector<16x128xf32>
    %9 = arith.truncf %8 : vector<16x128xf32> to vector<16x128xbf16>
    %c0_6 = arith.constant 0 : index
    %c0_7 = arith.constant 0 : index
    %10 = vector.load %arg6[%c0_6, %c0_7] : memref<16x128xbf16, #tpu.memory_space<vmem>>, vector<16x128xbf16>
    tpu.vector_store %arg6[%c0_6, %c0_7], %9 {strides = array<i32>} : memref<16x128xbf16, #tpu.memory_space<vmem>>, vector<16x128xbf16>,
    %c0_8 = arith.constant 0 : index
    %c0_9 = arith.constant 0 : index
    %11 = vector.load %arg5[%c0_8, %c0_9] : memref<16x1xi32, #tpu.memory_space<vmem>>, vector<16x1xi32>
    %12 = tpu.iota {dimensions = array<i32: 1>} : vector<16x128xi32>
    %c128_i32 = arith.constant 128 : i32
    %13 = arith.muli %arg1, %c128_i32 : i32
    %14 = vector.broadcast %13 : i32 to vector<16x128xi32>
    %15 = arith.addi %12, %14 : vector<16x128xi32>
    %cst_10 = arith.constant dense<0xFF800000> : vector<16xf32>
    %16 = vector.multi_reduction <maximumf>, %8, %cst_10 [1] : vector<16x128xf32> to vector<16xf32>
    %17 = vector.shape_cast %16 : vector<16xf32> to vector<16x1xf32>
    %c0_11 = arith.constant 0 : index
    %c0_12 = arith.constant 0 : index
    %18 = vector.load %arg8[%c0_11, %c0_12] : memref<16x1xf32, #tpu.memory_space<vmem>>, vector<16x1xf32>
    %19 = arith.maximumf %18, %17 : vector<16x1xf32>
    %20 = vector.broadcast %19 : vector<16x1xf32> to vector<16x128xf32>
    %21 = arith.subf %8, %20 : vector<16x128xf32>
    %22 = math.exp %21 : vector<16x128xf32>
    %c0_13 = arith.constant 0 : index
    %c0_14 = arith.constant 0 : index
    %23 = vector.load %arg9[%c0_13, %c0_14] : memref<16x1xf32, #tpu.memory_space<vmem>>, vector<16x1xf32>
    %c0_15 = arith.constant 0 : index
    %c0_16 = arith.constant 0 : index
    %24 = vector.load %arg8[%c0_15, %c0_16] : memref<16x1xf32, #tpu.memory_space<vmem>>, vector<16x1xf32>
    %25 = arith.subf %24, %19 : vector<16x1xf32>
    %26 = math.exp %25 : vector<16x1xf32>
    %27 = arith.mulf %23, %26 : vector<16x1xf32>
    %cst_17 = arith.constant dense<0.000000e+00> : vector<16xf32>
    %28 = vector.multi_reduction <add>, %22, %cst_17 [1] : vector<16x128xf32> to vector<16xf32>
    %29 = vector.shape_cast %28 : vector<16xf32> to vector<16x1xf32>
    %30 = arith.addf %27, %29 : vector<16x1xf32>
    %c0_18 = arith.constant 0 : index
    %c0_19 = arith.constant 0 : index
    %31 = vector.load %arg9[%c0_18, %c0_19] : memref<16x1xf32, #tpu.memory_space<vmem>>, vector<16x1xf32>
    tpu.vector_store %arg9[%c0_18, %c0_19], %30 {strides = array<i32>} : memref<16x1xf32, #tpu.memory_space<vmem>>, vector<16x1xf32>,
    %c0_20 = arith.constant 0 : index
    %c0_21 = arith.constant 0 : index
    %32 = vector.load %arg8[%c0_20, %c0_21] : memref<16x1xf32, #tpu.memory_space<vmem>>, vector<16x1xf32>
    tpu.vector_store %arg8[%c0_20, %c0_21], %19 {strides = array<i32>} : memref<16x1xf32, #tpu.memory_space<vmem>>, vector<16x1xf32>,
    %c0_22 = arith.constant 0 : index
    %c0_23 = arith.constant 0 : index
    %33 = vector.load %arg10[%c0_22, %c0_23] : memref<16x1xf32, #tpu.memory_space<vmem>>, vector<16x1xf32>
    %34 = vector.broadcast %11 : vector<16x1xi32> to vector<16x128xi32>
    %35 = arith.cmpi eq, %15, %34 : vector<16x128xi32>
    %cst_24 = arith.constant 0.000000e+00 : f32
    %36 = vector.broadcast %cst_24 : f32 to vector<16x128xf32>
    %37 = arith.select %35, %8, %36 : vector<16x128xi1>, vector<16x128xf32>
    %cst_25 = arith.constant dense<0.000000e+00> : vector<16xf32>
    %38 = vector.multi_reduction <add>, %37, %cst_25 [1] : vector<16x128xf32> to vector<16xf32>
    %39 = vector.shape_cast %38 : vector<16xf32> to vector<16x1xf32>
    %40 = arith.addf %33, %39 : vector<16x1xf32>
    %c0_26 = arith.constant 0 : index
    %c0_27 = arith.constant 0 : index
    %41 = vector.load %arg10[%c0_26, %c0_27] : memref<16x1xf32, #tpu.memory_space<vmem>>, vector<16x1xf32>
    tpu.vector_store %arg10[%c0_26, %c0_27], %40 {strides = array<i32>} : memref<16x1xf32, #tpu.memory_space<vmem>>, vector<16x1xf32>,
    %c0_i32_28 = arith.constant 0 : i32
    %42 = arith.cmpi eq, %arg1, %c0_i32_28 : i32
    %43 = arith.extui %42 : i1 to i32
    %c0_i32_29 = arith.constant 0 : i32
    %44 = arith.cmpi ne, %43, %c0_i32_29 : i32
    scf.if %44 {
      %c-100_i32 = arith.constant -100 : i32
      %45 = vector.broadcast %c-100_i32 : i32 to vector<16x1xi32>
      %46 = arith.cmpi ne, %11, %45 : vector<16x1xi32>
      %47 = arith.extui %46 : vector<16x1xi1> to vector<16x1xi32>
      %48 = arith.sitofp %47 : vector<16x1xi32> to vector<16x1xf32>
      %c0_30 = arith.constant 0 : index
      %c0_31 = arith.constant 0 : index
      %49 = vector.load %arg8[%c0_30, %c0_31] : memref<16x1xf32, #tpu.memory_space<vmem>>, vector<16x1xf32>
      %c0_32 = arith.constant 0 : index
      %c0_33 = arith.constant 0 : index
      %50 = vector.load %arg9[%c0_32, %c0_33] : memref<16x1xf32, #tpu.memory_space<vmem>>, vector<16x1xf32>
      %51 = math.log %50 : vector<16x1xf32>
      %52 = arith.addf %49, %51 : vector<16x1xf32>
      %c0_34 = arith.constant 0 : index
      %c0_35 = arith.constant 0 : index
      %53 = vector.load %arg10[%c0_34, %c0_35] : memref<16x1xf32, #tpu.memory_space<vmem>>, vector<16x1xf32>
      %54 = arith.subf %52, %53 : vector<16x1xf32>
      %55 = arith.mulf %54, %48 : vector<16x1xf32>
      %c0_36 = arith.constant 0 : index
      %c0_37 = arith.constant 0 : index
      %56 = vector.load %arg10[%c0_36, %c0_37] : memref<16x1xf32, #tpu.memory_space<vmem>>, vector<16x1xf32>
      %c0_38 = arith.constant 0 : index
      %c0_39 = arith.constant 0 : index
      %57 = vector.load %arg8[%c0_38, %c0_39] : memref<16x1xf32, #tpu.memory_space<vmem>>, vector<16x1xf32>
      %58 = arith.cmpf oge, %56, %57 : vector<16x1xf32>
      %59 = arith.extui %58 : vector<16x1xi1> to vector<16x1xi32>
      %60 = arith.sitofp %59 : vector<16x1xi32> to vector<16x1xf32>
      %61 = arith.mulf %60, %48 : vector<16x1xf32>
      %62 = tpu.iota {dimensions = array<i32: 1>} : vector<16x128xi32>
      %c0_i32_40 = arith.constant 0 : i32
      %63 = vector.broadcast %c0_i32_40 : i32 to vector<16x128xi32>
      %64 = arith.cmpi eq, %62, %63 : vector<16x128xi32>
      %cst_41 = arith.constant 0.000000e+00 : f32
      %65 = vector.shape_cast %55 : vector<16x1xf32> to vector<16x1xf32>
      %66 = vector.broadcast %65 : vector<16x1xf32> to vector<16x128xf32>
      %67 = vector.broadcast %cst_41 : f32 to vector<16x128xf32>
      %68 = arith.select %64, %66, %67 : vector<16x128xi1>, vector<16x128xf32>
      %c1_i32 = arith.constant 1 : i32
      %69 = vector.broadcast %c1_i32 : i32 to vector<16x128xi32>
      %70 = arith.cmpi eq, %62, %69 : vector<16x128xi32>
      %71 = vector.shape_cast %48 : vector<16x1xf32> to vector<16x1xf32>
      %72 = vector.broadcast %71 : vector<16x1xf32> to vector<16x128xf32>
      %73 = arith.select %70, %72, %68 : vector<16x128xi1>, vector<16x128xf32>
      %c2_i32 = arith.constant 2 : i32
      %74 = vector.broadcast %c2_i32 : i32 to vector<16x128xi32>
      %75 = arith.cmpi eq, %62, %74 : vector<16x128xi32>
      %76 = vector.shape_cast %61 : vector<16x1xf32> to vector<16x1xf32>
      %77 = vector.broadcast %76 : vector<16x1xf32> to vector<16x128xf32>
      %78 = arith.select %75, %77, %73 : vector<16x128xi1>, vector<16x128xf32>
      %c0_42 = arith.constant 0 : index
      %c0_43 = arith.constant 0 : index
      %79 = vector.load %arg7[%c0_42, %c0_43] : memref<16x128xf32, #tpu.memory_space<vmem>>, vector<16x128xf32>
      tpu.vector_store %arg7[%c0_42, %c0_43], %78 {strides = array<i32>} : memref<16x128xf32, #tpu.memory_space<vmem>>, vector<16x128xf32>,
    } else {
    }
    return
  }
  func.func @transform_0(%arg0: i32, %arg1: i32) -> (i32, i32) {
    %c0_i32 = arith.constant 0 : i32
    %c0_i32_0 = arith.constant 0 : i32
    return %arg0, %c0_i32 : i32, i32
  }
  func.func @transform_1(%arg0: i32, %arg1: i32) -> (i32, i32) {
    %c0_i32 = arith.constant 0 : i32
    %c0_i32_0 = arith.constant 0 : i32
    return %c0_i32, %arg1 : i32, i32
  }
  func.func @transform_2(%arg0: i32, %arg1: i32) -> (i32, i32) {
    %c0_i32 = arith.constant 0 : i32
    %c0_i32_0 = arith.constant 0 : i32
    return %c0_i32, %arg1 : i32, i32
  }
  func.func @transform_3(%arg0: i32, %arg1: i32) -> (i32, i32) {
    %c0_i32 = arith.constant 0 : i32
    %c0_i32_0 = arith.constant 0 : i32
    return %arg0, %c0_i32 : i32, i32
  }
  func.func @transform_4(%arg0: i32, %arg1: i32) -> (i32, i32) {
    %c0_i32 = arith.constant 0 : i32
    return %arg0, %arg1 : i32, i32
  }
  func.func @transform_5(%arg0: i32, %arg1: i32) -> (i32, i32) {
    %c0_i32 = arith.constant 0 : i32
    %c0_i32_0 = arith.constant 0 : i32
    return %arg0, %c0_i32 : i32, i32
  }
}

</mosaic_0001>

<llo_original>
// kernel: slam_forward.3
$region0: #{slam_forward.3}
  #allocation0 [shape = 'u32[]', space=smem, size = 0x4, offset = 0x4, fixed_abs, tag = 'smem constant byte address 0x4 - core index']
  #allocation1 [shape = 'u32[144,128]{1,0:T(1,128)}', space=vmem, size = 0x12000, scoped, tag = 'internal scratch']
  %s0 = inlined_call_operand.vmem [shape: bf16[16,32], index: 0, kind: input, shape index: {}]
  %s1 = inlined_call_operand.vmem [shape: bf16[32,32], index: 1, kind: input, shape index: {}]
  %s2 = inlined_call_operand.vmem [shape: f32[1,32], index: 2, kind: input, shape index: {}]
  %s3 = inlined_call_operand.vmem [shape: bf16[16,32], index: 3, kind: output, shape index: {}]
  %s4 = sld [smem:[#allocation0]]
  $region22: #{slam_forward.3} parent=0
    _
  %s6 = ssub.s32 1, %s4
  %s7 = scalar_select 0, %s6, %s4
  // Predicated region
  $region2: #{slam_forward.3} parent=0 // pred_check
    _
  $region3: #{slam_forward.3} parent=0 // pred_check_branch
    %9 = sbr.rel (0) target = $region5
  $region4: #{slam_forward.3} parent=0 // pred_region
    _
  $region5: #{slam_forward.3} parent=0 // pred_fallthru
    _
  // Predicated region
  $region6: #{slam_forward.3} parent=0 // pred_check
    _
  $region7: #{slam_forward.3} parent=0 // pred_check_branch
    %11 = sbr.rel (0) target = $region9
  $region8: #{slam_forward.3} parent=0 // pred_region
    _
  $region9: #{slam_forward.3} parent=0 // pred_fallthru
    _
  // Predicated region
  $region10: #{slam_forward.3} parent=0 // pred_check
    _
  $region11: #{slam_forward.3} parent=0 // pred_check_branch
    %13 = sbr.rel (0) target = $region13
  $region12: #{slam_forward.3} parent=0 // pred_region
    _
  $region13: #{slam_forward.3} parent=0 // pred_fallthru
    _
  %v15 = vld [vmem:[%s0] sm:$0xf]
  %v16 = vld [vmem:[%s0 + $0x4] sm:$0xf]
  %v17 = vld [vmem:[%s1] sm:$0xf]
  %v18 = vld [vmem:[%s1 + $0x4] sm:$0xf]
  %v19 = vld [vmem:[%s1 + $0x8] sm:$0xf]
  %v20 = vld [vmem:[%s1 + $0xc] sm:$0xf]
  %v21 = vld [vmem:[%s2] sm:$0x1]
  %v23 = vlaneseq
  %v24 = vshrl.u32 %v23, 7
  %v25 = vsub.s32 0, %v24
  %v26 = vrot.slane %v21, %v25
  %v30 = vunpack.c.l.b16 %v15
  %v31 = vunpack.c.l.b16 %v16
  %v32 = vpack.c.b16 %v31, %v30
  %v37 = vunpack.c.l.b16 %v17
  %v38 = vunpack.c.l.b16 %v18
  %v39 = vunpack.c.l.b16 %v19
  %v40 = vunpack.c.l.b16 %v20
  %v41 = vpack.c.b16 %v38, %v37
  %v42 = vpack.c.b16 %v40, %v39
  %vm45 = vcmask 261120
  %v47 = vsel %vm45, %v32, 0
  %49 = vmatprep.subr.bf16.mxu0 0
  %50 = vmatpush1.bf16.msra.mxu0 0
  %51 = vmatprep.subr.bf16.mxu0 0
  %52 = vmatpush1.bf16.msra.mxu0 0
  %53 = vmatprep.subr.bf16.mxu0 0
  %54 = vmatpush1.bf16.msra.mxu0 0
  %55 = vmatprep.subr.bf16.mxu0 0
  %56 = vmatpush1.bf16.msra.mxu0 0
  %57 = vmatprep.subr.bf16.mxu0 0
  %58 = vmatpush1.bf16.msra.mxu0 0
  %59 = vmatprep.subr.bf16.mxu0 0
  %60 = vmatpush1.bf16.msra.mxu0 0
  %61 = vmatprep.subr.bf16.mxu0 0
  %62 = vmatpush1.bf16.msra.mxu0 %v42
  %63 = vmatprep.subr.bf16.mxu0 0
  %64 = vmatpush1.bf16.msra.mxu0 %v41
  %65 = vmatprep.subr.bf16.mxu0 0
  %66 = vmatpush2.bf16.msra.mxu0 0
  %67 = vmatprep.subr.bf16.mxu0 0
  %68 = vmatpush2.bf16.msra.mxu0 0
  %69 = vmatprep.subr.bf16.mxu0 0
  %70 = vmatpush2.bf16.msra.mxu0 0
  %71 = vmatprep.subr.bf16.mxu0 0
  %72 = vmatpush2.bf16.msra.mxu0 0
  %73 = vmatprep.subr.bf16.mxu0 0
  %74 = vmatpush2.bf16.msra.mxu0 0
  %75 = vmatprep.subr.bf16.mxu0 0
  %76 = vmatpush2.bf16.msra.mxu0 0
  %77 = vmatprep.subr.bf16.mxu0 0
  %78 = vmatpush2.bf16.msra.mxu0 0
  %79 = vmatprep.subr.bf16.mxu0 0
  %80 = vmatpush2.bf16.msra.mxu0 0
  %81 = vmatprep.mubr.bf16.mxu0 0
  %82 = vmatmul.mubr.bf16.gmra.mxu0 %v47
  %v83 = vpop.f32.mrf.mxu0
  %v84 = vadd.f32 %v26, %v83
  %v85 = vpop.f32.mrf.mxu0
  %v86 = vpop.f32.mrf.mxu0
  %v87 = vadd.f32 %v26, %v86
  %v88 = vpop.f32.mrf.mxu0
  %89 = vdwg.mxu0
  %v90 = vpack.c.bf16 %v87, %v84
  %v92 = vunpack.c.l.b16 %v90
  %v93 = vunpack.c.h.b16 %v90
  %v94 = vpack.c.b16 %v92, %v92
  %v95 = vpack.c.b16 %v93, %v93
  %vm98 = vcmask 257024
  %99 = vst.msk [vmem:[%s3] sm:$0xf] %vm98, %v94
  %100 = vst.msk [vmem:[%s3 + $0x4] sm:$0xf] %vm98, %v95
  // Predicated region
  $region14: #{slam_forward.3} parent=0 // pred_check
    _
  $region15: #{slam_forward.3} parent=0 // pred_check_branch
    %102 = sbr.rel (0) target = $region17
  $region16: #{slam_forward.3} parent=0 // pred_region
    _
  $region17: #{slam_forward.3} parent=0 // pred_fallthru
    _
  // Predicated region
  $region18: #{slam_forward.3} parent=0 // pred_check
    _
  $region19: #{slam_forward.3} parent=0 // pred_check_branch
    %104 = sbr.rel (0) target = $region21
  $region20: #{slam_forward.3} parent=0 // pred_region
    _
  $region21: #{slam_forward.3} parent=0 // pred_fallthru
    _

// kernel: slam_forward.4
$region0: #{slam_forward.4}
  #allocation0 [shape = 'u32[]', space=smem, size = 0x4, offset = 0x4, fixed_abs, tag = 'smem constant byte address 0x4 - core index']
  #allocation1 [shape = 'u32[144,128]{1,0:T(1,128)}', space=vmem, size = 0x12000, scoped, tag = 'internal scratch']
  #allocation2 [shape = 'f32[16,32]{1,0:T(8,128)}', space=vmem, size = 0x2000, scoped, tag = 'scratch operand']
  #allocation3 [shape = 's32[1]{0}', space=sflag, size = 0x4, scoped, tag = 'scoped memory for slam_forward.4']
  #allocation4 [shape = 'u8[512]{0}', space=smem, size = 0x200, scoped, tag = 'prefetched SMEM operand 0']
  #allocation5 [shape = 'u8[512]{0}', space=smem, size = 0x200, scoped, tag = 'prefetched SMEM operand 1']
  %s0 = inlined_call_operand.vmem [shape: s32[2], index: 0, kind: input, shape index: {}]
  %s1 = inlined_call_operand.vmem [shape: s32[2], index: 1, kind: input, shape index: {}]
  %s2 = inlined_call_operand.vmem [shape: bf16[2,8,32], index: 2, kind: input, shape index: {}]
  %s3 = inlined_call_operand.vmem [shape: bf16[2,16,32], index: 3, kind: input, shape index: {}]
  %s4 = inlined_call_operand.vmem [shape: bf16[2,16,32], index: 4, kind: output, shape index: {}]
  %s5 = sld [smem:[#allocation0]]
  $region41: #{slam_forward.4} parent=0
    _
  %s7 = ssub.s32 1, %s5
  %s8 = scalar_select 0, %s7, %s5
  %s9 = sshll.u32 %s0, 4
  %s10 = int_to_ptr.vmem [resolvable:$true] %s9
  %12 = dma.vmem_to_smem %s10, 16, [#allocation4], [#allocation3]
  %s13 = sshll.u32 %s1, 4
  %s14 = int_to_ptr.vmem [resolvable:$true] %s13
  %16 = dma.vmem_to_smem %s14, 16, [#allocation5], [#allocation3]
  %17 = dma.done [#allocation3], 32
  %18 = sfence
  loop: start=0, step=1, limit=4
  $region2: #{slam_forward.4} parent=0 // loop_pre_header
    _
  $region3: #{slam_forward.4} parent=0 // loop_header
    %s20 = sphi 0, %s24
    %p21 = scmp.ge.s32.totalorder %s20, 4
    %s27 = sphi 0, %s39
    %s28 = sphi 0, %s35
    %s29 = sphi 0, %s27
    %s30 = sphi 0, %s28
    %s31 = sphi 0, %s29
    %s32 = sphi 0, %s30
    %s44 = sphi 0, %s46
    %s47 = sphi 0, %s44
    %s48 = sphi 0, %s47
    %s64 = sphi 0, %s48
    %s72 = sphi 0, %s74
    %s75 = sphi 0, %s72
    %s76 = sphi 0, %s75
    %s92 = sphi 0, %s76
    %s100 = sphi 0, %s102
    %s103 = sphi 0, %s100
    %s104 = sphi 0, %s103
    %s120 = sphi 0, %s104
  $region4: #{slam_forward.4} parent=0 // loop_header_branch
    %23 = sbr.rel (%p21) target = $region8
  $region5: #{slam_forward.4} parent=0 // loop_body
    %s25 = ssub.s32 %s20, 1
    %s26 = ssub.s32 %s20, 2
    %s33 = sadd.s32 1, %s28
    %p34 = scmp.ge.s32.totalorder %s33, 1
    %s35 = scalar_select %p34, 0, %s33
    %s36 = sadd.s32 1, %s27
    %s37 = scalar_select %p34, %s36, %s27
    %p38 = scmp.ge.s32.totalorder %s37, 2
    %s39 = scalar_select %p38, 0, %s37
    %s40 = ssub.s32 %s27, %s39
    %s41 = ssub.s32 %s28, %s35
    %s42 = sor.u32 %s40, %s41
    %p43 = scmp.eq.s32.totalorder %s42, 0
    %s45 = sadd.s32 %s44, 1
    %s46 = scalar_select %p43, %s44, %s45
    %p49 = pneg %p43
    %p50 = scmp.eq.s32.totalorder %s20, 1
    %p51 = por %p49, %p50
    %p52 = scmp.ne.s32.totalorder %s44, %s47
    %p53 = scmp.eq.s32.totalorder %s20, 0
    %p54 = por %p52, %p53
    %p55 = scmp.ne.s32.totalorder %s44, %s47
    %p56 = scmp.eq.s32.totalorder %s25, 1
    %p57 = por %p55, %p56
    %p58 = scmp.ne.s32.totalorder %s47, %s48
    %p59 = scmp.eq.s32.totalorder %s25, 0
    %p60 = por %p58, %p59
    %p61 = scmp.ne.s32.totalorder %s47, %s48
    %p62 = scmp.eq.s32.totalorder %s26, 1
    %p63 = por %p61, %p62
    %p65 = scmp.ne.s32.totalorder %s48, %s64
    %p66 = scmp.eq.s32.totalorder %s26, 0
    %p67 = por %p65, %p66
    %s68 = ssub.s32 %s27, %s39
    %s69 = ssub.s32 %s28, %s35
    %s70 = sor.u32 %s68, %s69
    %p71 = scmp.eq.s32.totalorder %s70, 0
    %s73 = sadd.s32 %s72, 1
    %s74 = scalar_select %p71, %s72, %s73
    %p77 = pneg %p71
    %p78 = scmp.eq.s32.totalorder %s20, 1
    %p79 = por %p77, %p78
    %p80 = scmp.ne.s32.totalorder %s72, %s75
    %p81 = scmp.eq.s32.totalorder %s20, 0
    %p82 = por %p80, %p81
    %p83 = scmp.ne.s32.totalorder %s72, %s75
    %p84 = scmp.eq.s32.totalorder %s25, 1
    %p85 = por %p83, %p84
    %p86 = scmp.ne.s32.totalorder %s75, %s76
    %p87 = scmp.eq.s32.totalorder %s25, 0
    %p88 = por %p86, %p87
    %p89 = scmp.ne.s32.totalorder %s75, %s76
    %p90 = scmp.eq.s32.totalorder %s26, 1
    %p91 = por %p89, %p90
    %p93 = scmp.ne.s32.totalorder %s76, %s92
    %p94 = scmp.eq.s32.totalorder %s26, 0
    %p95 = por %p93, %p94
    %s96 = ssub.s32 %s27, %s39
    %s97 = ssub.s32 %s28, %s35
    %s98 = sor.u32 %s96, %s97
    %p99 = scmp.eq.s32.totalorder %s98, 0
    %s101 = sadd.s32 %s100, 1
    %s102 = scalar_select %p99, %s100, %s101
    %p105 = pneg %p99
    %p106 = scmp.eq.s32.totalorder %s20, 1
    %p107 = por %p105, %p106
    %p108 = scmp.ne.s32.totalorder %s100, %s103
    %p109 = scmp.eq.s32.totalorder %s20, 0
    %p110 = por %p108, %p109
    %p111 = scmp.ne.s32.totalorder %s100, %s103
    %p112 = scmp.eq.s32.totalorder %s25, 1
    %p113 = por %p111, %p112
    %p114 = scmp.ne.s32.totalorder %s103, %s104
    %p115 = scmp.eq.s32.totalorder %s25, 0
    %p116 = por %p114, %p115
    %p117 = scmp.ne.s32.totalorder %s103, %s104
    %p118 = scmp.eq.s32.totalorder %s26, 1
    %p119 = por %p117, %p118
    %p121 = scmp.ne.s32.totalorder %s104, %s120
    %p122 = scmp.eq.s32.totalorder %s26, 0
    %p123 = por %p121, %p122
    %p124 = scmp.le.s32.totalorder 1, %s20
    %p125 = scmp.lt.s32.totalorder %s20, 3
    %p126 = pnand %p124, %p125
    %p127 = pneg %p126
    // Predicated region
    $region9: #{slam_forward.4} parent=5 // pred_check
      _
    $region10: #{slam_forward.4} parent=5 // pred_check_branch
      %129 = sbr.rel (%p126) target = $region12
    $region11: #{slam_forward.4} parent=5 // pred_region
      %s130 = ssub.s32 %s20, 1
    $region12: #{slam_forward.4} parent=5 // pred_fallthru
      _
    %p131 = scmp.lt.s32.totalorder %s20, 2
    // Predicated region
    $region13: #{slam_forward.4} parent=5 // pred_check
      %p132 = pneg %p131
    $region14: #{slam_forward.4} parent=5 // pred_check_branch
      %134 = sbr.rel (%p132) target = $region16
    $region15: #{slam_forward.4} parent=5 // pred_region
      // Predicated region
      $region17: #{slam_forward.4} parent=15 // pred_check
        %p135 = pneg %p54
      $region18: #{slam_forward.4} parent=15 // pred_check_branch
        %137 = sbr.rel (%p135) target = $region20
      $region19: #{slam_forward.4} parent=15 // pred_region
        %p138 = scmp.lt.s32.totalorder %s27, 1
        %s139 = scalar_select %p138, %s27, 1
        %p140 = scmp.lt.s32.totalorder %s28, 0
        %s141 = scalar_select %p140, %s28, 0
        %s142 = sadd.s32 %s141, %s139
        %s143 = smul.addr %s142, 4
        %s144 = scalar_lea.vmem %s2, %s143
      $region20: #{slam_forward.4} parent=15 // pred_fallthru
        _
      // Predicated region
      $region21: #{slam_forward.4} parent=15 // pred_check
        %p145 = pneg %p82
      $region22: #{slam_forward.4} parent=15 // pred_check_branch
        %147 = sbr.rel (%p145) target = $region24
      $region23: #{slam_forward.4} parent=15 // pred_region
        %p148 = scmp.lt.s32.totalorder %s27, 1
        %s149 = scalar_select %p148, %s27, 1
        %p150 = scmp.lt.s32.totalorder %s28, 0
        %s151 = scalar_select %p150, %s28, 0
        %s152 = smul.addr %s149, 2
        %s153 = sadd.s32 %s151, %s152
        %s154 = smul.addr %s153, 4
        %s155 = scalar_lea.vmem %s3, %s154
      $region24: #{slam_forward.4} parent=15 // pred_fallthru
        _
    $region16: #{slam_forward.4} parent=5 // pred_fallthru
      _
    %p156 = scmp.le.s32.totalorder 1, %s20
    %p157 = scmp.lt.s32.totalorder %s20, 3
    %p158 = pnand %p156, %p157
    %p159 = pneg %p158
    // Predicated region
    $region25: #{slam_forward.4} parent=5 // pred_check
      _
    $region26: #{slam_forward.4} parent=5 // pred_check_branch
      %161 = sbr.rel (%p158) target = $region28
    $region27: #{slam_forward.4} parent=5 // pred_region
      %s162 = ssub.s32 %s20, 1
      %p163 = scmp.lt.s32.totalorder %s29, 1
      %s164 = scalar_select %p163, %s29, 1
      %p165 = scmp.lt.s32.totalorder %s30, 0
      %s166 = scalar_select %p165, %s30, 0
      %s167 = sadd.s32 %s166, %s164
      %s168 = smul.addr %s167, 4
      %s169 = scalar_lea.vmem %s2, %s168
      %p170 = pneg %p60
      %p171 = pneg %p57
      %p172 = scmp.lt.s32.totalorder %s29, 1
      %s173 = scalar_select %p172, %s29, 1
      %p174 = scmp.lt.s32.totalorder %s30, 0
      %s175 = scalar_select %p174, %s30, 0
      %s176 = smul.addr %s173, 2
      %s177 = sadd.s32 %s175, %s176
      %s178 = smul.addr %s177, 4
      %s179 = scalar_lea.vmem %s3, %s178
      %p180 = pneg %p88
      %p181 = pneg %p85
      %p182 = pneg %p116
      %p183 = pneg %p113
      %p184 = scmp.lt.s32.totalorder %s29, 1
      %s185 = scalar_select %p184, %s29, 1
      %p186 = scmp.lt.s32.totalorder %s30, 0
      %s187 = scalar_select %p186, %s30, 0
      %s188 = smul.addr %s185, 2
      %s189 = sadd.s32 %s187, %s188
      %s190 = smul.addr %s189, 4
      %s191 = scalar_lea.vmem %s4, %s190
      %p192 = scmp.lt.s32.totalorder %s29, 1
      %s193 = scalar_select %p192, %s29, 1
      %p194 = scmp.lt.s32.totalorder %s30, 0
      %s195 = scalar_select %p194, %s30, 0
      %s196 = sadd.s32 %s195, %s193
      %s197 = smul.addr %s196, 4
      %s198 = scalar_lea.vmem %s2, %s197
      %p199 = scmp.lt.s32.totalorder %s29, 1
      %s200 = scalar_select %p199, %s29, 1
      %p201 = scmp.lt.s32.totalorder %s30, 0
      %s202 = scalar_select %p201, %s30, 0
      %s203 = smul.addr %s200, 2
      %s204 = sadd.s32 %s202, %s203
      %s205 = smul.addr %s204, 4
      %s206 = scalar_lea.vmem %s3, %s205
      %p207 = scmp.lt.s32.totalorder %s29, 1
      %s208 = scalar_select %p207, %s29, 1
      %p209 = scmp.lt.s32.totalorder %s30, 0
      %s210 = scalar_select %p209, %s30, 0
      %s211 = smul.addr %s208, 2
      %s212 = sadd.s32 %s210, %s211
      %s213 = smul.addr %s212, 4
      %s214 = scalar_lea.vmem %s4, %s213
      %s217 = sld [smem:[#allocation4 + %s29]]
      %s218 = sld [smem:[#allocation5 + %s29]]
      %p219 = scmp.lt.s32.totalorder %s218, 8
      %s220 = scalar_select %p219, %s218, 8
      %v221 = vld [vmem:[%s198] sm:$0xf]
      %v222 = vlaneseq
      %v223 = vshrl.u32 %v222, 7
      %v224 = vstv %s220
      %vm225 = vcmp.lt.s32.totalorder %v223, %v224
      %v226 = vunpack.c.l.bf16 %v221
      %v227 = vsel %vm225, 1, 0
      %vm228 = vcmp.eq.s32.totalorder %v227, 1
      %v229 = vsel %vm228, %v226, 0.0
      %vm230 = vcmask 261120
      %231 = vst.msk [vmem:[#allocation2] sm:$0xff] %vm230, %v229
      %232 = vst.msk [vmem:[#allocation2 + $0x8] sm:$0xff] %vm230, 0.0
      %v233 = vld [vmem:[#allocation2] sm:$0xff]
      %v234 = vld [vmem:[#allocation2 + $0x8] sm:$0xff]
      %s235 = sand.u32 %s217, 15
      %s236 = sand.u32 %s235, 7
      %s237 = sshrl.u32 %s235, 3
      %s238 = ssub.s32 8, %s236
      %v239 = vstv %s238
      %v240 = vrot.slane %v233, %v239
      %v241 = vstv %s238
      %v242 = vrot.slane %v234, %v241
      %v243 = vstv %s236
      %vm244 = vcmp.lt.s32.totalorder %v223, %v243
      %v245 = vsel %vm244, %v240, %v242
      %v246 = vsel %vm244, %v242, %v240
      %s247 = sand.u32 %s237, 1
      %v248 = vstv %s247
      %vm249 = vcmp.ne.s32.totalorder %v248, 0
      %v250 = vsel %vm249, %v245, %v246
      %v251 = vsel %vm249, %v246, %v245
      %v252 = vpack.c.bf16 %v251, %v250
      %v253 = vadd.s32 %v223, 8
      %v254 = vstv %s217
      %vm255 = vcmp.ge.s32.totalorder %v223, %v254
      %vm256 = vcmp.ge.s32.totalorder %v253, %v254
      %s257 = sadd.s32 %s217, %s218
      %v258 = vstv %s257
      %vm259 = vcmp.lt.s32.totalorder %v223, %v258
      %vm260 = vcmp.lt.s32.totalorder %v253, %v258
      %vm261 = vmand %vm255, %vm259
      %vm262 = vmand %vm256, %vm260
      %v263 = vld [vmem:[%s206] sm:$0xf]
      %v264 = vld [vmem:[%s206 + $0x4] sm:$0xf]
      %v265 = vsel %vm261, 1, 0
      %v266 = vsel %vm262, 1, 0
      %vm267 = vcmp.eq.s32.totalorder %v265, 1
      %vm268 = vcmp.eq.s32.totalorder %v266, 1
      %vm269 = vmpackc.low %vm267, %vm267
      %vm270 = vmpackc.low %vm268, %vm268
      %v271 = vsel %vm269, 65537, 0
      %v272 = vsel %vm270, 65537, 0
      %v273 = vunpack.c.l.b16 %v271
      %v274 = vunpack.c.l.b16 %v272
      %v275 = vpack.c.b16 %v274, %v273
      %vm276 = vcmp.ne.s16.totalorder %v275, 0
      %v279 = vunpack.c.l.b16 %v263
      %v280 = vunpack.c.l.b16 %v264
      %v281 = vpack.c.b16 %v280, %v279
      %v283 = vsel %vm276, %v252, %v281
      %v285 = vunpack.c.l.b16 %v283
      %v286 = vunpack.c.h.b16 %v283
      %v287 = vpack.c.b16 %v285, %v285
      %v288 = vpack.c.b16 %v286, %v286
      %vm291 = vcmask 257024
      %292 = vst.msk [vmem:[%s214] sm:$0xf] %vm291, %v287
      %293 = vst.msk [vmem:[%s214 + $0x4] sm:$0xf] %vm291, %v288
      %p294 = scmp.lt.s32.totalorder %s29, 1
      %s295 = scalar_select %p294, %s29, 1
      %p296 = scmp.lt.s32.totalorder %s30, 0
      %s297 = scalar_select %p296, %s30, 0
      %s298 = smul.addr %s295, 2
      %s299 = sadd.s32 %s297, %s298
      %s300 = smul.addr %s299, 4
      %s301 = scalar_lea.vmem %s4, %s300
      // Predicated region
      $region29: #{slam_forward.4} parent=27 // pred_check
        %p302 = pneg %p113
      $region30: #{slam_forward.4} parent=27 // pred_check_branch
        %304 = sbr.rel (%p302) target = $region32
      $region31: #{slam_forward.4} parent=27 // pred_region
        _
      $region32: #{slam_forward.4} parent=27 // pred_fallthru
        _
    $region28: #{slam_forward.4} parent=5 // pred_fallthru
      _
    %p305 = scmp.le.s32.totalorder 2, %s20
    // Predicated region
    $region33: #{slam_forward.4} parent=5 // pred_check
      %p306 = pneg %p305
    $region34: #{slam_forward.4} parent=5 // pred_check_branch
      %308 = sbr.rel (%p306) target = $region36
    $region35: #{slam_forward.4} parent=5 // pred_region
      %s309 = ssub.s32 %s20, 2
      // Predicated region
      $region37: #{slam_forward.4} parent=35 // pred_check
        %p310 = pneg %p119
      $region38: #{slam_forward.4} parent=35 // pred_check_branch
        %312 = sbr.rel (%p310) target = $region40
      $region39: #{slam_forward.4} parent=35 // pred_region
        %p313 = scmp.lt.s32.totalorder %s31, 1
        %s314 = scalar_select %p313, %s31, 1
        %p315 = scmp.lt.s32.totalorder %s32, 0
        %s316 = scalar_select %p315, %s32, 0
        %s317 = smul.addr %s314, 2
        %s318 = sadd.s32 %s316, %s317
        %s319 = smul.addr %s318, 4
        %s320 = scalar_lea.vmem %s4, %s319
      $region40: #{slam_forward.4} parent=35 // pred_fallthru
        _
    $region36: #{slam_forward.4} parent=5 // pred_fallthru
      _
  $region6: #{slam_forward.4} parent=0 // loop_footer
    %s24 = sadd.s32 1, %s20
  $region7: #{slam_forward.4} parent=0 // loop_footer_branch
    %19 = sbr.rel target = $region3
  $region8: #{slam_forward.4} parent=0 // loop_exit
    _

// kernel: slam_forward.5
$region0: #{slam_forward.5}
  #allocation0 [shape = 'u32[]', space=smem, size = 0x4, offset = 0x4, fixed_abs, tag = 'smem constant byte address 0x4 - core index']
  #allocation1 [shape = 'u32[144,128]{1,0:T(1,128)}', space=vmem, size = 0x12000, scoped, tag = 'internal scratch']
  #allocation2 [shape = 'f32[16,1]{1,0:T(8,128)}', space=vmem, size = 0x2000, scoped, tag = 'scratch operand']
  #allocation3 [shape = 'f32[16,1]{1,0:T(8,128)}', space=vmem, size = 0x2000, scoped, tag = 'scratch operand']
  #allocation4 [shape = 'f32[16,1]{1,0:T(8,128)}', space=vmem, size = 0x2000, scoped, tag = 'scratch operand']
  %s0 = inlined_call_operand.vmem [shape: bf16[32,32], index: 0, kind: input, shape index: {}]
  %s1 = inlined_call_operand.vmem [shape: bf16[32,128], index: 1, kind: input, shape index: {}]
  %s2 = inlined_call_operand.vmem [shape: f32[1,128], index: 2, kind: input, shape index: {}]
  %s3 = inlined_call_operand.vmem [shape: s32[32,1], index: 3, kind: input, shape index: {}]
  %s4 = inlined_call_operand.hbm [shape: bf16[32,128], index: 4, kind: output, shape index: {0}]
  %s5 = inlined_call_operand.vmem [shape: f32[32,128], index: 5, kind: output, shape index: {1}]
  %6 = xla_tuple %s4, %s5
  %s7 = sld [smem:[#allocation0]]
  $region65: #{slam_forward.5} parent=0
    _
  %s9 = ssub.s32 1, %s7
  %s10 = scalar_select 0, %s9, %s7
  $region1: #{slam_forward.5} parent=0
    #allocation5 [shape = 'u8[8192]{0}', space=vmem, size = 0x2000, scoped, tag = 'output window, operand 0']
    #allocation6 [shape = 's32[2]{0}', space=sflag, size = 0x8, scoped, tag = 'scoped memory for slam_forward.5']
    %11 = vsyncpa [#allocation6], 0
    %s12 = scalar_lea.sflag [#allocation6], 1
    %13 = vsyncpa %s12, 0
    loop: start=0, step=1, limit=4
    $region2: #{slam_forward.5} parent=1 // loop_pre_header
      _
    $region3: #{slam_forward.5} parent=1 // loop_header
      %s15 = sphi 0, %s19
      %p16 = scmp.ge.s32.totalorder %s15, 4
      %s22 = sphi 0, %s34
      %s23 = sphi 0, %s30
      %s24 = sphi 0, %s22
      %s25 = sphi 0, %s23
      %s26 = sphi 0, %s24
      %s27 = sphi 0, %s25
      %s37 = sphi 0, %s39
      %s40 = sphi 0, %s37
      %s41 = sphi 0, %s40
      %s57 = sphi 0, %s41
      %s63 = sphi 0, %s65
      %s66 = sphi 0, %s63
      %s67 = sphi 0, %s66
      %s83 = sphi 0, %s67
      %s89 = sphi 0, %s91
      %s92 = sphi 0, %s89
      %s93 = sphi 0, %s92
      %s109 = sphi 0, %s93
      %s115 = sphi 0, %s117
      %s118 = sphi 0, %s115
      %s119 = sphi 0, %s118
      %s135 = sphi 0, %s119
      %s143 = sphi 0, %s145
      %s146 = sphi 0, %s143
      %s147 = sphi 0, %s146
      %s163 = sphi 0, %s147
      %s169 = sphi 0, %s171
      %s172 = sphi 0, %s169
      %s173 = sphi 0, %s172
      %s189 = sphi 0, %s173
    $region4: #{slam_forward.5} parent=1 // loop_header_branch
      %18 = sbr.rel (%p16) target = $region8
    $region5: #{slam_forward.5} parent=1 // loop_body
      %s20 = ssub.s32 %s15, 1
      %s21 = ssub.s32 %s15, 2
      %s28 = sadd.s32 1, %s23
      %p29 = scmp.ge.s32.totalorder %s28, 1
      %s30 = scalar_select %p29, 0, %s28
      %s31 = sadd.s32 1, %s22
      %s32 = scalar_select %p29, %s31, %s22
      %p33 = scmp.ge.s32.totalorder %s32, 2
      %s34 = scalar_select %p33, 0, %s32
      %s35 = ssub.s32 %s22, %s34
      %p36 = scmp.eq.s32.totalorder %s35, 0
      %s38 = sadd.s32 %s37, 1
      %s39 = scalar_select %p36, %s37, %s38
      %p42 = pneg %p36
      %p43 = scmp.eq.s32.totalorder %s15, 1
      %p44 = por %p42, %p43
      %p45 = scmp.ne.s32.totalorder %s37, %s40
      %p46 = scmp.eq.s32.totalorder %s15, 0
      %p47 = por %p45, %p46
      %p48 = scmp.ne.s32.totalorder %s37, %s40
      %p49 = scmp.eq.s32.totalorder %s20, 1
      %p50 = por %p48, %p49
      %p51 = scmp.ne.s32.totalorder %s40, %s41
      %p52 = scmp.eq.s32.totalorder %s20, 0
      %p53 = por %p51, %p52
      %p54 = scmp.ne.s32.totalorder %s40, %s41
      %p55 = scmp.eq.s32.totalorder %s21, 1
      %p56 = por %p54, %p55
      %p58 = scmp.ne.s32.totalorder %s41, %s57
      %p59 = scmp.eq.s32.totalorder %s21, 0
      %p60 = por %p58, %p59
      %s61 = ssub.s32 %s23, %s30
      %p62 = scmp.eq.s32.totalorder %s61, 0
      %s64 = sadd.s32 %s63, 1
      %s65 = scalar_select %p62, %s63, %s64
      %p68 = pneg %p62
      %p69 = scmp.eq.s32.totalorder %s15, 1
      %p70 = por %p68, %p69
      %p71 = scmp.ne.s32.totalorder %s63, %s66
      %p72 = scmp.eq.s32.totalorder %s15, 0
      %p73 = por %p71, %p72
      %p74 = scmp.ne.s32.totalorder %s63, %s66
      %p75 = scmp.eq.s32.totalorder %s20, 1
      %p76 = por %p74, %p75
      %p77 = scmp.ne.s32.totalorder %s66, %s67
      %p78 = scmp.eq.s32.totalorder %s20, 0
      %p79 = por %p77, %p78
      %p80 = scmp.ne.s32.totalorder %s66, %s67
      %p81 = scmp.eq.s32.totalorder %s21, 1
      %p82 = por %p80, %p81
      %p84 = scmp.ne.s32.totalorder %s67, %s83
      %p85 = scmp.eq.s32.totalorder %s21, 0
      %p86 = por %p84, %p85
      %s87 = ssub.s32 %s23, %s30
      %p88 = scmp.eq.s32.totalorder %s87, 0
      %s90 = sadd.s32 %s89, 1
      %s91 = scalar_select %p88, %s89, %s90
      %p94 = pneg %p88
      %p95 = scmp.eq.s32.totalorder %s15, 1
      %p96 = por %p94, %p95
      %p97 = scmp.ne.s32.totalorder %s89, %s92
      %p98 = scmp.eq.s32.totalorder %s15, 0
      %p99 = por %p97, %p98
      %p100 = scmp.ne.s32.totalorder %s89, %s92
      %p101 = scmp.eq.s32.totalorder %s20, 1
      %p102 = por %p100, %p101
      %p103 = scmp.ne.s32.totalorder %s92, %s93
      %p104 = scmp.eq.s32.totalorder %s20, 0
      %p105 = por %p103, %p104
      %p106 = scmp.ne.s32.totalorder %s92, %s93
      %p107 = scmp.eq.s32.totalorder %s21, 1
      %p108 = por %p106, %p107
      %p110 = scmp.ne.s32.totalorder %s93, %s109
      %p111 = scmp.eq.s32.totalorder %s21, 0
      %p112 = por %p110, %p111
      %s113 = ssub.s32 %s22, %s34
      %p114 = scmp.eq.s32.totalorder %s113, 0
      %s116 = sadd.s32 %s115, 1
      %s117 = scalar_select %p114, %s115, %s116
      %p120 = pneg %p114
      %p121 = scmp.eq.s32.totalorder %s15, 1
      %p122 = por %p120, %p121
      %p123 = scmp.ne.s32.totalorder %s115, %s118
      %p124 = scmp.eq.s32.totalorder %s15, 0
      %p125 = por %p123, %p124
      %p126 = scmp.ne.s32.totalorder %s115, %s118
      %p127 = scmp.eq.s32.totalorder %s20, 1
      %p128 = por %p126, %p127
      %p129 = scmp.ne.s32.totalorder %s118, %s119
      %p130 = scmp.eq.s32.totalorder %s20, 0
      %p131 = por %p129, %p130
      %p132 = scmp.ne.s32.totalorder %s118, %s119
      %p133 = scmp.eq.s32.totalorder %s21, 1
      %p134 = por %p132, %p133
      %p136 = scmp.ne.s32.totalorder %s119, %s135
      %p137 = scmp.eq.s32.totalorder %s21, 0
      %p138 = por %p136, %p137
      %s139 = ssub.s32 %s22, %s34
      %s140 = ssub.s32 %s23, %s30
      %s141 = sor.u32 %s139, %s140
      %p142 = scmp.eq.s32.totalorder %s141, 0
      %s144 = sadd.s32 %s143, 1
      %s145 = scalar_select %p142, %s143, %s144
      %p148 = pneg %p142
      %p149 = scmp.eq.s32.totalorder %s15, 1
      %p150 = por %p148, %p149
      %p151 = scmp.ne.s32.totalorder %s143, %s146
      %p152 = scmp.eq.s32.totalorder %s15, 0
      %p153 = por %p151, %p152
      %p154 = scmp.ne.s32.totalorder %s143, %s146
      %p155 = scmp.eq.s32.totalorder %s20, 1
      %p156 = por %p154, %p155
      %p157 = scmp.ne.s32.totalorder %s146, %s147
      %p158 = scmp.eq.s32.totalorder %s20, 0
      %p159 = por %p157, %p158
      %p160 = scmp.ne.s32.totalorder %s146, %s147
      %p161 = scmp.eq.s32.totalorder %s21, 1
      %p162 = por %p160, %p161
      %p164 = scmp.ne.s32.totalorder %s147, %s163
      %p165 = scmp.eq.s32.totalorder %s21, 0
      %p166 = por %p164, %p165
      %s167 = ssub.s32 %s22, %s34
      %p168 = scmp.eq.s32.totalorder %s167, 0
      %s170 = sadd.s32 %s169, 1
      %s171 = scalar_select %p168, %s169, %s170
      %p174 = pneg %p168
      %p175 = scmp.eq.s32.totalorder %s15, 1
      %p176 = por %p174, %p175
      %p177 = scmp.ne.s32.totalorder %s169, %s172
      %p178 = scmp.eq.s32.totalorder %s15, 0
      %p179 = por %p177, %p178
      %p180 = scmp.ne.s32.totalorder %s169, %s172
      %p181 = scmp.eq.s32.totalorder %s20, 1
      %p182 = por %p180, %p181
      %p183 = scmp.ne.s32.totalorder %s172, %s173
      %p184 = scmp.eq.s32.totalorder %s20, 0
      %p185 = por %p183, %p184
      %p186 = scmp.ne.s32.totalorder %s172, %s173
      %p187 = scmp.eq.s32.totalorder %s21, 1
      %p188 = por %p186, %p187
      %p190 = scmp.ne.s32.totalorder %s173, %s189
      %p191 = scmp.eq.s32.totalorder %s21, 0
      %p192 = por %p190, %p191
      %p193 = scmp.le.s32.totalorder 1, %s15
      %p194 = scmp.lt.s32.totalorder %s15, 3
      %p195 = pnand %p193, %p194
      %p196 = pneg %p195
      // Predicated region
      $region9: #{slam_forward.5} parent=5 // pred_check
        _
      $region10: #{slam_forward.5} parent=5 // pred_check_branch
        %198 = sbr.rel (%p195) target = $region12
      $region11: #{slam_forward.5} parent=5 // pred_region
        %s199 = ssub.s32 %s15, 1
        // Predicated region
        $region13: #{slam_forward.5} parent=11 // pred_check
          %p200 = pneg %p79
        $region14: #{slam_forward.5} parent=11 // pred_check_branch
          %202 = sbr.rel (%p200) target = $region16
        $region15: #{slam_forward.5} parent=11 // pred_region
          %p203 = scmp.lt.s32.totalorder %s25, 0
          %s204 = scalar_select %p203, %s25, 0
          %s205 = smul.addr %s204, 4
          %s206 = scalar_lea.vmem %s1, %s205
        $region16: #{slam_forward.5} parent=11 // pred_fallthru
          _
        // Predicated region
        $region17: #{slam_forward.5} parent=11 // pred_check
          %p207 = pneg %p105
        $region18: #{slam_forward.5} parent=11 // pred_check_branch
          %209 = sbr.rel (%p207) target = $region20
        $region19: #{slam_forward.5} parent=11 // pred_region
          %p210 = scmp.lt.s32.totalorder %s25, 0
          %s211 = scalar_select %p210, %s25, 0
          %s212 = scalar_lea.vmem %s2, %s211
        $region20: #{slam_forward.5} parent=11 // pred_fallthru
          _
      $region12: #{slam_forward.5} parent=5 // pred_fallthru
        _
      %p213 = scmp.lt.s32.totalorder %s15, 2
      // Predicated region
      $region21: #{slam_forward.5} parent=5 // pred_check
        %p214 = pneg %p213
      $region22: #{slam_forward.5} parent=5 // pred_check_branch
        %216 = sbr.rel (%p214) target = $region24
      $region23: #{slam_forward.5} parent=5 // pred_region
        // Predicated region
        $region25: #{slam_forward.5} parent=23 // pred_check
          %p217 = pneg %p47
        $region26: #{slam_forward.5} parent=23 // pred_check_branch
          %219 = sbr.rel (%p217) target = $region28
        $region27: #{slam_forward.5} parent=23 // pred_region
          %s220 = smul.u32 2, %s22
          %p221 = scmp.lt.s32.totalorder %s220, 3
          %s222 = scalar_select %p221, %s220, 3
          %s223 = smul.addr %s222, 4
          %s224 = scalar_lea.vmem %s0, %s223
          %s225 = smul.u32 2, %s22
        $region28: #{slam_forward.5} parent=23 // pred_fallthru
          _
        // Predicated region
        $region29: #{slam_forward.5} parent=23 // pred_check
          %p226 = pneg %p125
        $region30: #{slam_forward.5} parent=23 // pred_check_branch
          %228 = sbr.rel (%p226) target = $region32
        $region31: #{slam_forward.5} parent=23 // pred_region
          %s229 = smul.u32 2, %s22
          %p230 = scmp.lt.s32.totalorder %s229, 3
          %s231 = scalar_select %p230, %s229, 3
          %s232 = smul.addr %s231, 8
          %s233 = scalar_lea.vmem %s3, %s232
          %s234 = smul.u32 2, %s22
        $region32: #{slam_forward.5} parent=23 // pred_fallthru
          _
      $region24: #{slam_forward.5} parent=5 // pred_fallthru
        _
      %p235 = scmp.le.s32.totalorder 1, %s15
      %p236 = scmp.lt.s32.totalorder %s15, 3
      %p237 = pnand %p235, %p236
      %p238 = pneg %p237
      // Predicated region
      $region33: #{slam_forward.5} parent=5 // pred_check
        _
      $region34: #{slam_forward.5} parent=5 // pred_check_branch
        %240 = sbr.rel (%p237) target = $region36
      $region35: #{slam_forward.5} parent=5 // pred_region
        %s241 = ssub.s32 %s15, 1
        %s242 = smul.u32 2, %s24
        %p243 = scmp.lt.s32.totalorder %s242, 3
        %s244 = scalar_select %p243, %s242, 3
        %s245 = smul.addr %s244, 4
        %s246 = scalar_lea.vmem %s0, %s245
        %p247 = pneg %p53
        %p248 = pneg %p50
        %p249 = scmp.lt.s32.totalorder %s25, 0
        %s250 = scalar_select %p249, %s25, 0
        %s251 = smul.addr %s250, 4
        %s252 = scalar_lea.vmem %s1, %s251
        %p253 = pneg %p79
        %p254 = pneg %p76
        %p255 = scmp.lt.s32.totalorder %s25, 0
        %s256 = scalar_select %p255, %s25, 0
        %s257 = scalar_lea.vmem %s2, %s256
        %p258 = pneg %p105
        %p259 = pneg %p102
        %s260 = smul.u32 2, %s24
        %p261 = scmp.lt.s32.totalorder %s260, 3
        %s262 = scalar_select %p261, %s260, 3
        %s263 = smul.addr %s262, 8
        %s264 = scalar_lea.vmem %s3, %s263
        %p265 = pneg %p131
        %p266 = pneg %p128
        %p267 = pneg %p159
        %p268 = pneg %p156
        %s269 = sand.u32 %s146, 1
        %s270 = scalar_lea.sflag [#allocation6], %s269
        %s271 = sand.u32 %s146, 1
        %s272 = smul.addr %s271, 8
        %s273 = scalar_lea.vmem [#allocation5], %s272
        %p274 = pneg %p185
        %p275 = pneg %p182
        %s276 = smul.u32 2, %s24
        %p277 = scmp.lt.s32.totalorder %s276, 3
        %s278 = scalar_select %p277, %s276, 3
        %s279 = smul.addr %s278, 8
        %s280 = scalar_lea.vmem %s5, %s279
        %s281 = smul.u32 2, %s24
        %p282 = scmp.lt.s32.totalorder %s281, 3
        %s283 = scalar_select %p282, %s281, 3
        %s284 = smul.addr %s283, 4
        %s285 = scalar_lea.vmem %s0, %s284
        %s286 = smul.u32 2, %s24
        %p287 = scmp.lt.s32.totalorder %s25, 0
        %s288 = scalar_select %p287, %s25, 0
        %s289 = smul.addr %s288, 4
        %s290 = scalar_lea.vmem %s1, %s289
        %p291 = scmp.lt.s32.totalorder %s25, 0
        %s292 = scalar_select %p291, %s25, 0
        %s293 = scalar_lea.vmem %s2, %s292
        %s294 = smul.u32 2, %s24
        %p295 = scmp.lt.s32.totalorder %s294, 3
        %s296 = scalar_select %p295, %s294, 3
        %s297 = smul.addr %s296, 8
        %s298 = scalar_lea.vmem %s3, %s297
        %s299 = smul.u32 2, %s24
        %s300 = smul.u32 2, %s24
        %s301 = smul.u32 2, %s24
        %p302 = scmp.lt.s32.totalorder %s301, 3
        %s303 = scalar_select %p302, %s301, 3
        %s304 = smul.addr %s303, 8
        %s305 = scalar_lea.vmem %s5, %s304
        %s306 = smul.u32 2, %s24
        %p308 = scmp.eq.s32.totalorder %s25, 0
        // Predicated region
        $region37: #{slam_forward.5} parent=35 // pred_check
          %p309 = pneg %p308
        $region38: #{slam_forward.5} parent=35 // pred_check_branch
          %311 = sbr.rel (%p309) target = $region40
        $region39: #{slam_forward.5} parent=35 // pred_region
          %vm312 = vcmask 7168
          %313 = vst.msk [vmem:[#allocation2] sm:$0xff] %vm312, -inf
          %314 = vst.msk [vmem:[#allocation2 + $0x8] sm:$0xff] %vm312, -inf
          %315 = vst.msk [vmem:[#allocation3] sm:$0xff] %vm312, 0.0
          %316 = vst.msk [vmem:[#allocation3 + $0x8] sm:$0xff] %vm312, 0.0
          %317 = vst.msk [vmem:[#allocation4] sm:$0xff] %vm312, 0.0
          %318 = vst.msk [vmem:[#allocation4 + $0x8] sm:$0xff] %vm312, 0.0
        $region40: #{slam_forward.5} parent=35 // pred_fallthru
          _
        %v319 = vld [vmem:[%s285] sm:$0xf]
        %v320 = vld [vmem:[%s285 + $0x4] sm:$0xf]
        %v321 = vld [vmem:[%s290] sm:$0xf]
        %v322 = vld [vmem:[%s290 + $0x4] sm:$0xf]
        %v323 = vld [vmem:[%s290 + $0x8] sm:$0xf]
        %v324 = vld [vmem:[%s290 + $0xc] sm:$0xf]
        %v325 = vld [vmem:[%s293] sm:$0x1]
        %v327 = vlaneseq
        %v328 = vshrl.u32 %v327, 7
        %v329 = vsub.s32 0, %v328
        %v330 = vrot.slane %v325, %v329
        %v334 = vunpack.c.l.b16 %v319
        %v335 = vunpack.c.l.b16 %v320
        %v336 = vpack.c.b16 %v335, %v334
        %v341 = vunpack.c.l.b16 %v321
        %v342 = vunpack.c.l.b16 %v322
        %v343 = vunpack.c.l.b16 %v323
        %v344 = vunpack.c.l.b16 %v324
        %v345 = vpack.c.b16 %v342, %v341
        %v346 = vpack.c.b16 %v344, %v343
        %vm349 = vcmask 261120
        %v351 = vsel %vm349, %v336, 0
        %353 = vmatprep.subr.bf16.mxu0 0
        %354 = vmatpush1.bf16.msra.mxu0 0
        %355 = vmatprep.subr.bf16.mxu0 0
        %356 = vmatpush1.bf16.msra.mxu0 0
        %357 = vmatprep.subr.bf16.mxu0 0
        %358 = vmatpush1.bf16.msra.mxu0 0
        %359 = vmatprep.subr.bf16.mxu0 0
        %360 = vmatpush1.bf16.msra.mxu0 0
        %361 = vmatprep.subr.bf16.mxu0 0
        %362 = vmatpush1.bf16.msra.mxu0 0
        %363 = vmatprep.subr.bf16.mxu0 0
        %364 = vmatpush1.bf16.msra.mxu0 0
        %365 = vmatprep.subr.bf16.mxu0 0
        %366 = vmatpush1.bf16.msra.mxu0 %v346
        %367 = vmatprep.subr.bf16.mxu0 0
        %368 = vmatpush1.bf16.msra.mxu0 %v345
        %369 = vmatprep.subr.bf16.mxu0 0
        %370 = vmatpush2.bf16.msra.mxu0 0
        %371 = vmatprep.subr.bf16.mxu0 0
        %372 = vmatpush2.bf16.msra.mxu0 0
        %373 = vmatprep.subr.bf16.mxu0 0
        %374 = vmatpush2.bf16.msra.mxu0 0
        %375 = vmatprep.subr.bf16.mxu0 0
        %376 = vmatpush2.bf16.msra.mxu0 0
        %377 = vmatprep.subr.bf16.mxu0 0
        %378 = vmatpush2.bf16.msra.mxu0 0
        %379 = vmatprep.subr.bf16.mxu0 0
        %380 = vmatpush2.bf16.msra.mxu0 0
        %381 = vmatprep.subr.bf16.mxu0 0
        %382 = vmatpush2.bf16.msra.mxu0 0
        %383 = vmatprep.subr.bf16.mxu0 0
        %384 = vmatpush2.bf16.msra.mxu0 0
        %385 = vmatprep.mubr.bf16.mxu0 0
        %386 = vmatmul.mubr.bf16.gmra.mxu0 %v351
        %v387 = vpop.f32.mrf.mxu0
        %v388 = vadd.f32 %v330, %v387
        %v389 = vpop.f32.mrf.mxu0
        %v390 = vpop.f32.mrf.mxu0
        %v391 = vadd.f32 %v330, %v390
        %v392 = vpop.f32.mrf.mxu0
        %393 = vdwg.mxu0
        %v394 = vpack.c.bf16 %v391, %v388
        %v396 = vunpack.c.l.b16 %v394
        %v397 = vunpack.c.h.b16 %v394
        %v398 = vpack.c.b16 %v396, %v396
        %v399 = vpack.c.b16 %v397, %v397
        %402 = vst [vmem:[%s273] sm:$0xf] %v398
        %403 = vst [vmem:[%s273 + $0x4] sm:$0xf] %v399
        %v404 = vld [vmem:[%s298] sm:$0xff]
        %v405 = vld [vmem:[%s298 + $0x8] sm:$0xff]
        %v406 = vlaneseq
        %v407 = vand.u32 %v406, 127
        %s408 = smul.u32 %s25, 128
        %v409 = vstv %s408
        %v410 = vadd.s32 %v407, %v409
        %411 = vmax.xlane.f32.xlu0 %v388
        %v412 = vpop.xlane.xlu0 %411
        %413 = vmax.xlane.f32.xlu0 %v391
        %v414 = vpop.xlane.xlu0 %413
        %v415 = vld [vmem:[#allocation2] sm:$0xff]
        %v416 = vld [vmem:[#allocation2 + $0x8] sm:$0xff]
        %v417 = vmax.f32 %v415, %v412
        %v418 = vmax.f32 %v416, %v414
        %420 = vset.pattern.permute.xlu0 0
        %421 = vperm.xlu0 %420, %v417
        %v422 = vpop.permute.xlu0 %421
        %425 = vset.pattern.permute.xlu0 0
        %426 = vperm.xlu0 %425, %v418
        %v427 = vpop.permute.xlu0 %426
        %v429 = vsub.f32 %v388, %v422
        %v430 = vsub.f32 %v391, %v427
        %v431 = vmul.f32 %v429, 1.442695
        %v432 = vpow.pop %v431
        %v433 = vmul.f32 %v430, 1.442695
        %v434 = vpow.pop %v433
        %v435 = vld [vmem:[#allocation3] sm:$0xff]
        %v436 = vld [vmem:[#allocation3 + $0x8] sm:$0xff]
        %v437 = vsub.f32 %v415, %v417
        %v438 = vsub.f32 %v416, %v418
        %v439 = vmul.f32 %v437, 1.442695
        %v440 = vpow.pop %v439
        %v441 = vmul.f32 %v438, 1.442695
        %v442 = vpow.pop %v441
        %v443 = vmul.f32 %v435, %v440
        %v444 = vmul.f32 %v436, %v442
        %445 = vadd.xlane.f32.xlu0 %v432
        %v446 = vpop.xlane.xlu0 %445
        %447 = vadd.xlane.f32.xlu0 %v434
        %v448 = vpop.xlane.xlu0 %447
        %v449 = vadd.f32 %v443, %v446
        %v450 = vadd.f32 %v444, %v448
        %vm451 = vcmask 7168
        %452 = vst.msk [vmem:[#allocation3] sm:$0xff] %vm451, %v449
        %453 = vst.msk [vmem:[#allocation3 + $0x8] sm:$0xff] %vm451, %v450
        %454 = vst.msk [vmem:[#allocation2] sm:$0xff] %vm451, %v417
        %455 = vst.msk [vmem:[#allocation2 + $0x8] sm:$0xff] %vm451, %v418
        %v456 = vld [vmem:[#allocation4] sm:$0xff]
        %v457 = vld [vmem:[#allocation4 + $0x8] sm:$0xff]
        %458 = vset.pattern.permute.xlu0 0
        %459 = vperm.xlu0 %458, %v404
        %v460 = vpop.permute.xlu0 %459
        %461 = vset.pattern.permute.xlu0 0
        %462 = vperm.xlu0 %461, %v405
        %v463 = vpop.permute.xlu0 %462
        %vm464 = vcmp.eq.s32.totalorder %v410, %v460
        %vm465 = vcmp.eq.s32.totalorder %v410, %v463
        %v466 = vsel %vm464, %v388, 0.0
        %v467 = vsel %vm465, %v391, 0.0
        %468 = vadd.xlane.f32.xlu0 %v466
        %v469 = vpop.xlane.xlu0 %468
        %470 = vadd.xlane.f32.xlu0 %v467
        %v471 = vpop.xlane.xlu0 %470
        %v472 = vadd.f32 %v456, %v469
        %v473 = vadd.f32 %v457, %v471
        %474 = vst.msk [vmem:[#allocation4] sm:$0xff] %vm451, %v472
        %475 = vst.msk [vmem:[#allocation4 + $0x8] sm:$0xff] %vm451, %v473
        // Predicated region
        $region41: #{slam_forward.5} parent=35 // pred_check
          %p476 = pneg %p308
        $region42: #{slam_forward.5} parent=35 // pred_check_branch
          %478 = sbr.rel (%p476) target = $region44
        $region43: #{slam_forward.5} parent=35 // pred_region
          %vm479 = vcmp.ne.s32.totalorder %v404, 4294967196
          %vm480 = vcmp.ne.s32.totalorder %v405, 4294967196
          %v481 = vsel %vm479, 1, 0
          %v482 = vsel %vm480, 1, 0
          %v483 = vcvt.s32.f32 %v481
          %v484 = vcvt.s32.f32 %v482
          %v485 = vld [vmem:[#allocation2] sm:$0xff]
          %v486 = vld [vmem:[#allocation2 + $0x8] sm:$0xff]
          %v487 = vld [vmem:[#allocation3] sm:$0xff]
          %v488 = vld [vmem:[#allocation3 + $0x8] sm:$0xff]
          %v489 = vlog2.pop %v487
          %v490 = vmul.f32 %v489, 0.6931472
          %v491 = vlog2.pop %v488
          %v492 = vmul.f32 %v491, 0.6931472
          %v493 = vadd.f32 %v485, %v490
          %v494 = vadd.f32 %v486, %v492
          %v495 = vld [vmem:[#allocation4] sm:$0xff]
          %v496 = vld [vmem:[#allocation4 + $0x8] sm:$0xff]
          %v497 = vsub.f32 %v493, %v495
          %v498 = vsub.f32 %v494, %v496
          %v499 = vmul.f32 %v497, %v483
          %v500 = vmul.f32 %v498, %v484
          %vm501 = vcmp.ge.f32.partialorder %v495, %v485
          %vm502 = vcmp.ge.f32.partialorder %v496, %v486
          %v503 = vsel %vm501, 1, 0
          %v504 = vsel %vm502, 1, 0
          %v505 = vcvt.s32.f32 %v503
          %v506 = vcvt.s32.f32 %v504
          %v507 = vmul.f32 %v505, %v483
          %v508 = vmul.f32 %v506, %v484
          %vm509 = vcmp.eq.s32.totalorder %v407, 0
          %511 = vset.pattern.permute.xlu0 0
          %512 = vperm.xlu0 %511, %v499
          %v513 = vpop.permute.xlu0 %512
          %516 = vset.pattern.permute.xlu0 0
          %517 = vperm.xlu0 %516, %v500
          %v518 = vpop.permute.xlu0 %517
          %v520 = vsel %vm509, %v513, 0.0
          %v521 = vsel %vm509, %v518, 0.0
          %vm522 = vcmp.eq.s32.totalorder %v407, 1
          %524 = vset.pattern.permute.xlu0 0
          %525 = vperm.xlu0 %524, %v483
          %v526 = vpop.permute.xlu0 %525
          %529 = vset.pattern.permute.xlu0 0
          %530 = vperm.xlu0 %529, %v484
          %v531 = vpop.permute.xlu0 %530
          %v533 = vsel %vm522, %v526, %v520
          %v534 = vsel %vm522, %v531, %v521
          %vm535 = vcmp.eq.s32.totalorder %v407, 2
          %537 = vset.pattern.permute.xlu0 0
          %538 = vperm.xlu0 %537, %v507
          %v539 = vpop.permute.xlu0 %538
          %542 = vset.pattern.permute.xlu0 0
          %543 = vperm.xlu0 %542, %v508
          %v544 = vpop.permute.xlu0 %543
          %v546 = vsel %vm535, %v539, %v533
          %v547 = vsel %vm535, %v544, %v534
          %548 = vst [vmem:[%s305] sm:$0xff] %v546
          %549 = vst [vmem:[%s305 + $0x8] sm:$0xff] %v547
        $region44: #{slam_forward.5} parent=35 // pred_fallthru
          _
        %s550 = sand.u32 %s146, 1
        %s551 = scalar_lea.sflag [#allocation6], %s550
        %s552 = sand.u32 %s146, 1
        %s553 = smul.addr %s552, 8
        %s554 = scalar_lea.vmem [#allocation5], %s553
        %s555 = smul.u32 2, %s24
        %p556 = scmp.lt.s32.totalorder %s555, 3
        %s557 = scalar_select %p556, %s555, 3
        %s558 = smul.addr %s557, 8
        %s559 = scalar_lea.vmem %s5, %s558
        // Predicated region
        $region45: #{slam_forward.5} parent=35 // pred_check
          %p560 = pneg %p156
        $region46: #{slam_forward.5} parent=35 // pred_check_branch
          %562 = sbr.rel (%p560) target = $region48
        $region47: #{slam_forward.5} parent=35 // pred_region
          %s563 = smul.u32 2, %s24
          %s565 = ssub.s32 128, 128
          %566 = vsyncadd %s551, %s565
          %s567 = sadd.s32 %s25, %s563
          %s568 = smul.addr %s567, 64
          %s569 = scalar_lea.hbm %s4, %s568
          %s570 = sshll.u32 %s554, 4
          %s571 = int_to_ptr.vmem [resolvable:$true] %s570
          %576 = dma.vmem_to_hbm [thread:$0]  %s571, 128, %s569, %s551, 64, 64, 4
        $region48: #{slam_forward.5} parent=35 // pred_fallthru
          _
        // Predicated region
        $region49: #{slam_forward.5} parent=35 // pred_check
          %p577 = pneg %p182
        $region50: #{slam_forward.5} parent=35 // pred_check_branch
          %579 = sbr.rel (%p577) target = $region52
        $region51: #{slam_forward.5} parent=35 // pred_region
          %s580 = smul.u32 2, %s24
        $region52: #{slam_forward.5} parent=35 // pred_fallthru
          _
      $region36: #{slam_forward.5} parent=5 // pred_fallthru
        _
      %p581 = scmp.le.s32.totalorder 2, %s15
      // Predicated region
      $region53: #{slam_forward.5} parent=5 // pred_check
        %p582 = pneg %p581
      $region54: #{slam_forward.5} parent=5 // pred_check_branch
        %584 = sbr.rel (%p582) target = $region56
      $region55: #{slam_forward.5} parent=5 // pred_region
        %s585 = ssub.s32 %s15, 2
        // Predicated region
        $region57: #{slam_forward.5} parent=55 // pred_check
          %p586 = pneg %p162
        $region58: #{slam_forward.5} parent=55 // pred_check_branch
          %588 = sbr.rel (%p586) target = $region60
        $region59: #{slam_forward.5} parent=55 // pred_region
          %s589 = sand.u32 %s147, 1
          %s590 = scalar_lea.sflag [#allocation6], %s589
          %s591 = sand.u32 %s147, 1
          %s592 = smul.addr %s591, 8
          %s593 = scalar_lea.vmem [#allocation5], %s592
          %594 = dma.done %s590, 128
        $region60: #{slam_forward.5} parent=55 // pred_fallthru
          _
        // Predicated region
        $region61: #{slam_forward.5} parent=55 // pred_check
          %p595 = pneg %p188
        $region62: #{slam_forward.5} parent=55 // pred_check_branch
          %597 = sbr.rel (%p595) target = $region64
        $region63: #{slam_forward.5} parent=55 // pred_region
          %s598 = smul.u32 2, %s26
          %p599 = scmp.lt.s32.totalorder %s598, 3
          %s600 = scalar_select %p599, %s598, 3
          %s601 = smul.addr %s600, 8
          %s602 = scalar_lea.vmem %s5, %s601
        $region64: #{slam_forward.5} parent=55 // pred_fallthru
          _
      $region56: #{slam_forward.5} parent=5 // pred_fallthru
        _
    $region6: #{slam_forward.5} parent=1 // loop_footer
      %s19 = sadd.s32 1, %s15
    $region7: #{slam_forward.5} parent=1 // loop_footer_branch
      %14 = sbr.rel target = $region3
    $region8: #{slam_forward.5} parent=1 // loop_exit
      _
    %603 = vsyncpa [#allocation6], 1
    %s604 = scalar_lea.sflag [#allocation6], 1
    %605 = vsyncpa %s604, 1

</llo_original>
